<compile_context>
chip_gen: v5e
topology: v5e:2x2
jax: 0.10.0
libtpu: 0.0.40
codegen_flags: <defaults>
</compile_context>

<pallas_src>
import functools

import jax
import jax.numpy as jnp
from jax.experimental import pallas as pl
from jax.experimental.pallas import tpu as pltpu

NEG_SLOPE = 0.01      # nn.LeakyReLU default negative_slope
NUM_CLASSES = 2       # module's fixed output_size


def _round_up(x, m):
    return ((x + m - 1) // m) * m


def mlp_mach3_kernel(
    x_ref,
    w1_ref, b1_ref, w2_ref, b2_ref, w3_ref, b3_ref,
    w4_ref, b4_ref, w5_ref, b5_ref, w6_ref, b6_ref,
    w7_ref, b7_ref,
    o_ref,
    *, groups, bf16_act,
):
    """One batch tile of the fused 7-layer MLP + 2-class softmax.

    All arrays are lane-packed by `groups` (G): x_ref is [Bt/G, in*G] bf16,
    weights are block-diagonal [in*G, out*G] bf16, biases are [1, out*G] f32.
    fc7 is packed so cols [0:G] are class-0 logits and cols [G:2G] class-1.
    """
    act_dtype = jnp.bfloat16 if bf16_act else jnp.float32
    h = x_ref[...]                                     # [Bt/G, in*G] bf16

    # fc1..fc6 with LeakyReLU; MXU accumulates in f32, elementwise in act_dtype.
    for w_ref, b_ref in (
        (w1_ref, b1_ref), (w2_ref, b2_ref), (w3_ref, b3_ref),
        (w4_ref, b4_ref), (w5_ref, b5_ref), (w6_ref, b6_ref),
    ):
        acc = jnp.dot(h, w_ref[...], preferred_element_type=jnp.float32)
        a = acc.astype(act_dtype) + b_ref[...].astype(act_dtype)
        h = jnp.where(a > 0, a, NEG_SLOPE * a).astype(jnp.bfloat16)

    # fc7 (no activation): packed logits [Bt/G, 2G], f32.
    logits = jnp.dot(h, w7_ref[...], preferred_element_type=jnp.float32) + b7_ref[...]

    # 2-class softmax == sigmoid of the per-group logit difference
    # (no XLU reduce, no divide; reciprocal rides the EUP slot).
    d = logits[:, :groups] - logits[:, groups:]        # [Bt/G, G]
    p0 = pl.reciprocal(1.0 + jnp.exp(-d), approx=False)
    p1 = 1.0 - p0
    o_ref[...] = jnp.concatenate([p0, p1], axis=1).astype(o_ref.dtype)


def prepare_params(params, groups=8):
    """One-time preprocessing (outside the jitted forward).

    params: list of 7 (W [out, in], b [out]) pairs (PyTorch nn.Linear layout).
    Returns a flat tuple of lane-packed weights/biases:
      fc1..fc6: kron(I_G, W.T) bf16 [in*G, out*G], tiled bias f32 [1, out*G]
      fc7:      [class-0 | class-1] block-columns bf16 [h6*G, 2G],
                repeated bias f32 [1, 2G]
    """
    assert len(params) == 7
    eye = jnp.eye(groups, dtype=jnp.float32)
    flat = []
    for w, b in params[:6]:
        wt = jnp.asarray(w, jnp.float32).T                       # [in, out]
        flat.append(jnp.kron(eye, wt).astype(jnp.bfloat16))      # block-diag
        flat.append(jnp.tile(jnp.asarray(b, jnp.float32), groups)[None, :])
    w7, b7 = params[6]
    w7t = jnp.asarray(w7, jnp.float32).T                         # [h6, 2]
    packed_w7 = jnp.concatenate(
        [jnp.kron(eye, w7t[:, 0:1]), jnp.kron(eye, w7t[:, 1:2])], axis=1)
    flat.append(packed_w7.astype(jnp.bfloat16))                  # [h6*G, 2G]
    flat.append(jnp.repeat(jnp.asarray(b7, jnp.float32), groups)[None, :])
    return tuple(flat)


@functools.partial(jax.jit, static_argnames=("groups", "block_b", "bf16_act"))
def mlp_mach3_forward(x, flat_params, *, groups=8, block_b=2048, bf16_act=True):
    """x: [B, input_size] f32.  flat_params: output of prepare_params(groups=...)."""
    B, in_dim = x.shape
    g = groups

    # Batch tile in original rows: multiple of 8*G so the packed sublane dim is
    # a multiple of 8.  At block_b=2048, G=8 the double-buffered x tile is
    # (256,128) bf16 = 64 KiB and the out tile (256,16) f32 = 16 KiB; packed
    # weights total ~0.7 MiB (VMEM-resident) -> far inside every chip's VMEM.
    bt = min(_round_up(block_b, 8 * g), _round_up(B, 8 * g))
    bp = _round_up(B, bt)

    x = x.astype(jnp.bfloat16)                       # cast once: halves input DMA
    if bp != B:
        x = jnp.pad(x, ((0, bp - B), (0, 0)))        # ragged-tail padding (zeros)
    xp = x.reshape(bp // g, g * in_dim)              # lane-pack G batch rows

    in_specs = [pl.BlockSpec((bt // g, g * in_dim), lambda i: (i, 0))]
    for p in flat_params:
        # Full-array blocks with constant index maps: weights/biases stay
        # resident in VMEM across all batch-grid steps.
        in_specs.append(pl.BlockSpec(p.shape, lambda i: (0, 0)))

    out_packed = pl.pallas_call(
        functools.partial(mlp_mach3_kernel, groups=g, bf16_act=bf16_act),
        out_shape=jax.ShapeDtypeStruct((bp // g, 2 * g), jnp.float32),
        grid=(bp // bt,),
        in_specs=in_specs,
        out_specs=pl.BlockSpec((bt // g, 2 * g), lambda i: (i, 0)),
        compiler_params=pltpu.CompilerParams(
            dimension_semantics=("parallel",)),      # megacore batch sharding
    )(xp, *flat_params)

    # Un-pack: cols [0:G] are p0, cols [G:2G] are p1, group j <-> row r*G + j.
    p0 = out_packed[:, :g].reshape(bp)
    p1 = out_packed[:, g:].reshape(bp)
    return jnp.stack([p0, p1], axis=1)[:B]


def init_linear(key, out_features, in_features):
    """Deterministic init mirroring nn.Linear's uniform(-1/sqrt(fan_in), ...)."""
    kw, kb = jax.random.split(key)
    bound = 1.0 / jnp.sqrt(jnp.float32(in_features))
    w = jax.random.uniform(kw, (out_features, in_features), jnp.float32,
                           -bound, bound)
    b = jax.random.uniform(kb, (out_features,), jnp.float32, -bound, bound)
    return w, b


if __name__ == "__main__":
    # Small shapes consistent with the module: 7 Linear layers, output_size=2.
    input_size = 16
    hiddens = (32, 32, 32, 32, 32, 32)
    output_size = 2
    batch = 200        # not a multiple of the tile -> exercises ragged-tail padding
    groups = 8         # lane-pack factor (use 4 on v5e)
    block_b = 128      # -> 2 grid steps: exercises the batch pipeline + padding

    key = jax.random.PRNGKey(0)
    keys = jax.random.split(key, 8)

    dims = (input_size,) + hiddens + (output_size,)
    params = [init_linear(keys[i], dims[i + 1], dims[i]) for i in range(7)]
    flat_params = prepare_params(params, groups=groups)   # one-time packing

    x = jax.random.normal(keys[7], (batch, input_size), jnp.float32)

    out = mlp_mach3_forward(x, flat_params, groups=groups, block_b=block_b)
    out = jax.block_until_ready(out)

    # Pure-JAX f32 reference (dropout=None -> dropout branches inactive).
    ref = x
    for i, (w, b) in enumerate(params):
        ref = ref @ w.T + b
        if i < 6:
            ref = jnp.where(ref > 0, ref, NEG_SLOPE * ref)
    ref = jax.nn.softmax(ref, axis=1)

    assert out.shape == (batch, output_size)
    # bf16 matmul inputs + bf16 elementwise -> looser tolerance than pure f32.
    assert jnp.allclose(out, ref, atol=2e-2), float(jnp.max(jnp.abs(out - ref)))
    assert jnp.allclose(jnp.sum(out, axis=1), 1.0, atol=1e-5)

    print("KERNEL_OK")
</pallas_src>

<mosaic_0001>
module attributes {stable_mosaic.version = 11 : i64} {
  func.func @mlp_mach3_kernel(%arg0: i32, %arg1: memref<16x128xbf16, #tpu.memory_space<vmem>>, %arg2: memref<128x256xbf16, #tpu.memory_space<vmem>>, %arg3: memref<1x256xf32, #tpu.memory_space<vmem>>, %arg4: memref<256x256xbf16, #tpu.memory_space<vmem>>, %arg5: memref<1x256xf32, #tpu.memory_space<vmem>>, %arg6: memref<256x256xbf16, #tpu.memory_space<vmem>>, %arg7: memref<1x256xf32, #tpu.memory_space<vmem>>, %arg8: memref<256x256xbf16, #tpu.memory_space<vmem>>, %arg9: memref<1x256xf32, #tpu.memory_space<vmem>>, %arg10: memref<256x256xbf16, #tpu.memory_space<vmem>>, %arg11: memref<1x256xf32, #tpu.memory_space<vmem>>, %arg12: memref<256x256xbf16, #tpu.memory_space<vmem>>, %arg13: memref<1x256xf32, #tpu.memory_space<vmem>>, %arg14: memref<256x16xbf16, #tpu.memory_space<vmem>>, %arg15: memref<1x16xf32, #tpu.memory_space<vmem>>, %arg16: memref<16x16xf32, #tpu.memory_space<vmem>>) attributes {dimension_semantics = [#tpu.dimension_semantics<parallel>], iteration_bounds = array<i64: 2>, scalar_prefetch = 0 : i64, scratch_operands = 0 : i64, tpu.core_type = #tpu.core_type<tc>, window_params = [{transform_indices = @transform_0, window_bounds = array<i64: 16, 128>}, {pipeline_mode = #tpu.pipeline_mode<synchronous>, transform_indices = @transform_1, window_bounds = array<i64: 128, 256>}, {pipeline_mode = #tpu.pipeline_mode<synchronous>, transform_indices = @transform_2, window_bounds = array<i64: 1, 256>}, {pipeline_mode = #tpu.pipeline_mode<synchronous>, transform_indices = @transform_3, window_bounds = array<i64: 256, 256>}, {pipeline_mode = #tpu.pipeline_mode<synchronous>, transform_indices = @transform_4, window_bounds = array<i64: 1, 256>}, {pipeline_mode = #tpu.pipeline_mode<synchronous>, transform_indices = @transform_5, window_bounds = array<i64: 256, 256>}, {pipeline_mode = #tpu.pipeline_mode<synchronous>, transform_indices = @transform_6, window_bounds = array<i64: 1, 256>}, {pipeline_mode = #tpu.pipeline_mode<synchronous>, transform_indices = @transform_7, window_bounds = array<i64: 256, 256>}, {pipeline_mode = #tpu.pipeline_mode<synchronous>, transform_indices = @transform_8, window_bounds = array<i64: 1, 256>}, {pipeline_mode = #tpu.pipeline_mode<synchronous>, transform_indices = @transform_9, window_bounds = array<i64: 256, 256>}, {pipeline_mode = #tpu.pipeline_mode<synchronous>, transform_indices = @transform_10, window_bounds = array<i64: 1, 256>}, {pipeline_mode = #tpu.pipeline_mode<synchronous>, transform_indices = @transform_11, window_bounds = array<i64: 256, 256>}, {pipeline_mode = #tpu.pipeline_mode<synchronous>, transform_indices = @transform_12, window_bounds = array<i64: 1, 256>}, {pipeline_mode = #tpu.pipeline_mode<synchronous>, transform_indices = @transform_13, window_bounds = array<i64: 256, 16>}, {pipeline_mode = #tpu.pipeline_mode<synchronous>, transform_indices = @transform_14, window_bounds = array<i64: 1, 16>}, {transform_indices = @transform_15, window_bounds = array<i64: 16, 16>}]} {
    %c0 = arith.constant 0 : index
    %c0_0 = arith.constant 0 : index
    %0 = vector.load %arg1[%c0, %c0_0] : memref<16x128xbf16, #tpu.memory_space<vmem>>, vector<16x128xbf16>
    %c0_1 = arith.constant 0 : index
    %c0_2 = arith.constant 0 : index
    %1 = vector.load %arg2[%c0_1, %c0_2] : memref<128x256xbf16, #tpu.memory_space<vmem>>, vector<128x256xbf16>
    %cst = arith.constant dense<0.000000e+00> : vector<16x256xf32>
    %2 = tpu.matmul %0, %1, %cst {dimension_numbers = #tpu.dot_dimension_numbers<[1], [0], [0], [1], [0, 0, 1, 1], [], []>} : vector<16x128xbf16>, vector<128x256xbf16>, vector<16x256xf32> -> vector<16x256xf32>
    %3 = arith.truncf %2 : vector<16x256xf32> to vector<16x256xbf16>
    %c0_3 = arith.constant 0 : index
    %c0_4 = arith.constant 0 : index
    %4 = vector.load %arg3[%c0_3, %c0_4] : memref<1x256xf32, #tpu.memory_space<vmem>>, vector<1x256xf32>
    %5 = arith.truncf %4 : vector<1x256xf32> to vector<1x256xbf16>
    %6 = vector.broadcast %5 : vector<1x256xbf16> to vector<16x256xbf16>
    %7 = arith.addf %3, %6 : vector<16x256xbf16>
    %cst_5 = arith.constant 0.000000e+00 : bf16
    %8 = vector.broadcast %cst_5 : bf16 to vector<16x256xbf16>
    %9 = arith.cmpf ogt, %7, %8 : vector<16x256xbf16>
    %cst_6 = arith.constant 1.000980e-02 : bf16
    %10 = vector.broadcast %cst_6 : bf16 to vector<16x256xbf16>
    %11 = arith.mulf %10, %7 : vector<16x256xbf16>
    %12 = arith.select %9, %7, %11 : vector<16x256xi1>, vector<16x256xbf16>
    %c0_7 = arith.constant 0 : index
    %c0_8 = arith.constant 0 : index
    %13 = vector.load %arg4[%c0_7, %c0_8] : memref<256x256xbf16, #tpu.memory_space<vmem>>, vector<256x256xbf16>
    %cst_9 = arith.constant dense<0.000000e+00> : vector<16x256xf32>
    %14 = tpu.matmul %12, %13, %cst_9 {dimension_numbers = #tpu.dot_dimension_numbers<[1], [0], [0], [1], [0, 0, 1, 1], [], []>} : vector<16x256xbf16>, vector<256x256xbf16>, vector<16x256xf32> -> vector<16x256xf32>
    %15 = arith.truncf %14 : vector<16x256xf32> to vector<16x256xbf16>
    %c0_10 = arith.constant 0 : index
    %c0_11 = arith.constant 0 : index
    %16 = vector.load %arg5[%c0_10, %c0_11] : memref<1x256xf32, #tpu.memory_space<vmem>>, vector<1x256xf32>
    %17 = arith.truncf %16 : vector<1x256xf32> to vector<1x256xbf16>
    %18 = vector.broadcast %17 : vector<1x256xbf16> to vector<16x256xbf16>
    %19 = arith.addf %15, %18 : vector<16x256xbf16>
    %cst_12 = arith.constant 0.000000e+00 : bf16
    %20 = vector.broadcast %cst_12 : bf16 to vector<16x256xbf16>
    %21 = arith.cmpf ogt, %19, %20 : vector<16x256xbf16>
    %cst_13 = arith.constant 1.000980e-02 : bf16
    %22 = vector.broadcast %cst_13 : bf16 to vector<16x256xbf16>
    %23 = arith.mulf %22, %19 : vector<16x256xbf16>
    %24 = arith.select %21, %19, %23 : vector<16x256xi1>, vector<16x256xbf16>
    %c0_14 = arith.constant 0 : index
    %c0_15 = arith.constant 0 : index
    %25 = vector.load %arg6[%c0_14, %c0_15] : memref<256x256xbf16, #tpu.memory_space<vmem>>, vector<256x256xbf16>
    %cst_16 = arith.constant dense<0.000000e+00> : vector<16x256xf32>
    %26 = tpu.matmul %24, %25, %cst_16 {dimension_numbers = #tpu.dot_dimension_numbers<[1], [0], [0], [1], [0, 0, 1, 1], [], []>} : vector<16x256xbf16>, vector<256x256xbf16>, vector<16x256xf32> -> vector<16x256xf32>
    %27 = arith.truncf %26 : vector<16x256xf32> to vector<16x256xbf16>
    %c0_17 = arith.constant 0 : index
    %c0_18 = arith.constant 0 : index
    %28 = vector.load %arg7[%c0_17, %c0_18] : memref<1x256xf32, #tpu.memory_space<vmem>>, vector<1x256xf32>
    %29 = arith.truncf %28 : vector<1x256xf32> to vector<1x256xbf16>
    %30 = vector.broadcast %29 : vector<1x256xbf16> to vector<16x256xbf16>
    %31 = arith.addf %27, %30 : vector<16x256xbf16>
    %cst_19 = arith.constant 0.000000e+00 : bf16
    %32 = vector.broadcast %cst_19 : bf16 to vector<16x256xbf16>
    %33 = arith.cmpf ogt, %31, %32 : vector<16x256xbf16>
    %cst_20 = arith.constant 1.000980e-02 : bf16
    %34 = vector.broadcast %cst_20 : bf16 to vector<16x256xbf16>
    %35 = arith.mulf %34, %31 : vector<16x256xbf16>
    %36 = arith.select %33, %31, %35 : vector<16x256xi1>, vector<16x256xbf16>
    %c0_21 = arith.constant 0 : index
    %c0_22 = arith.constant 0 : index
    %37 = vector.load %arg8[%c0_21, %c0_22] : memref<256x256xbf16, #tpu.memory_space<vmem>>, vector<256x256xbf16>
    %cst_23 = arith.constant dense<0.000000e+00> : vector<16x256xf32>
    %38 = tpu.matmul %36, %37, %cst_23 {dimension_numbers = #tpu.dot_dimension_numbers<[1], [0], [0], [1], [0, 0, 1, 1], [], []>} : vector<16x256xbf16>, vector<256x256xbf16>, vector<16x256xf32> -> vector<16x256xf32>
    %39 = arith.truncf %38 : vector<16x256xf32> to vector<16x256xbf16>
    %c0_24 = arith.constant 0 : index
    %c0_25 = arith.constant 0 : index
    %40 = vector.load %arg9[%c0_24, %c0_25] : memref<1x256xf32, #tpu.memory_space<vmem>>, vector<1x256xf32>
    %41 = arith.truncf %40 : vector<1x256xf32> to vector<1x256xbf16>
    %42 = vector.broadcast %41 : vector<1x256xbf16> to vector<16x256xbf16>
    %43 = arith.addf %39, %42 : vector<16x256xbf16>
    %cst_26 = arith.constant 0.000000e+00 : bf16
    %44 = vector.broadcast %cst_26 : bf16 to vector<16x256xbf16>
    %45 = arith.cmpf ogt, %43, %44 : vector<16x256xbf16>
    %cst_27 = arith.constant 1.000980e-02 : bf16
    %46 = vector.broadcast %cst_27 : bf16 to vector<16x256xbf16>
    %47 = arith.mulf %46, %43 : vector<16x256xbf16>
    %48 = arith.select %45, %43, %47 : vector<16x256xi1>, vector<16x256xbf16>
    %c0_28 = arith.constant 0 : index
    %c0_29 = arith.constant 0 : index
    %49 = vector.load %arg10[%c0_28, %c0_29] : memref<256x256xbf16, #tpu.memory_space<vmem>>, vector<256x256xbf16>
    %cst_30 = arith.constant dense<0.000000e+00> : vector<16x256xf32>
    %50 = tpu.matmul %48, %49, %cst_30 {dimension_numbers = #tpu.dot_dimension_numbers<[1], [0], [0], [1], [0, 0, 1, 1], [], []>} : vector<16x256xbf16>, vector<256x256xbf16>, vector<16x256xf32> -> vector<16x256xf32>
    %51 = arith.truncf %50 : vector<16x256xf32> to vector<16x256xbf16>
    %c0_31 = arith.constant 0 : index
    %c0_32 = arith.constant 0 : index
    %52 = vector.load %arg11[%c0_31, %c0_32] : memref<1x256xf32, #tpu.memory_space<vmem>>, vector<1x256xf32>
    %53 = arith.truncf %52 : vector<1x256xf32> to vector<1x256xbf16>
    %54 = vector.broadcast %53 : vector<1x256xbf16> to vector<16x256xbf16>
    %55 = arith.addf %51, %54 : vector<16x256xbf16>
    %cst_33 = arith.constant 0.000000e+00 : bf16
    %56 = vector.broadcast %cst_33 : bf16 to vector<16x256xbf16>
    %57 = arith.cmpf ogt, %55, %56 : vector<16x256xbf16>
    %cst_34 = arith.constant 1.000980e-02 : bf16
    %58 = vector.broadcast %cst_34 : bf16 to vector<16x256xbf16>
    %59 = arith.mulf %58, %55 : vector<16x256xbf16>
    %60 = arith.select %57, %55, %59 : vector<16x256xi1>, vector<16x256xbf16>
    %c0_35 = arith.constant 0 : index
    %c0_36 = arith.constant 0 : index
    %61 = vector.load %arg12[%c0_35, %c0_36] : memref<256x256xbf16, #tpu.memory_space<vmem>>, vector<256x256xbf16>
    %cst_37 = arith.constant dense<0.000000e+00> : vector<16x256xf32>
    %62 = tpu.matmul %60, %61, %cst_37 {dimension_numbers = #tpu.dot_dimension_numbers<[1], [0], [0], [1], [0, 0, 1, 1], [], []>} : vector<16x256xbf16>, vector<256x256xbf16>, vector<16x256xf32> -> vector<16x256xf32>
    %63 = arith.truncf %62 : vector<16x256xf32> to vector<16x256xbf16>
    %c0_38 = arith.constant 0 : index
    %c0_39 = arith.constant 0 : index
    %64 = vector.load %arg13[%c0_38, %c0_39] : memref<1x256xf32, #tpu.memory_space<vmem>>, vector<1x256xf32>
    %65 = arith.truncf %64 : vector<1x256xf32> to vector<1x256xbf16>
    %66 = vector.broadcast %65 : vector<1x256xbf16> to vector<16x256xbf16>
    %67 = arith.addf %63, %66 : vector<16x256xbf16>
    %cst_40 = arith.constant 0.000000e+00 : bf16
    %68 = vector.broadcast %cst_40 : bf16 to vector<16x256xbf16>
    %69 = arith.cmpf ogt, %67, %68 : vector<16x256xbf16>
    %cst_41 = arith.constant 1.000980e-02 : bf16
    %70 = vector.broadcast %cst_41 : bf16 to vector<16x256xbf16>
    %71 = arith.mulf %70, %67 : vector<16x256xbf16>
    %72 = arith.select %69, %67, %71 : vector<16x256xi1>, vector<16x256xbf16>
    %c0_42 = arith.constant 0 : index
    %c0_43 = arith.constant 0 : index
    %73 = vector.load %arg14[%c0_42, %c0_43] : memref<256x16xbf16, #tpu.memory_space<vmem>>, vector<256x16xbf16>
    %cst_44 = arith.constant dense<0.000000e+00> : vector<16x16xf32>
    %74 = tpu.matmul %72, %73, %cst_44 {dimension_numbers = #tpu.dot_dimension_numbers<[1], [0], [0], [1], [0, 0, 1, 1], [], []>} : vector<16x256xbf16>, vector<256x16xbf16>, vector<16x16xf32> -> vector<16x16xf32>
    %c0_45 = arith.constant 0 : index
    %c0_46 = arith.constant 0 : index
    %75 = vector.load %arg15[%c0_45, %c0_46] : memref<1x16xf32, #tpu.memory_space<vmem>>, vector<1x16xf32>
    %76 = vector.broadcast %75 : vector<1x16xf32> to vector<16x16xf32>
    %77 = arith.addf %74, %76 : vector<16x16xf32>
    %78 = vector.extract_strided_slice %77 {offsets = [0, 0], sizes = [16, 8], strides = [1, 1]} : vector<16x16xf32> to vector<16x8xf32>
    %79 = vector.extract_strided_slice %77 {offsets = [0, 8], sizes = [16, 8], strides = [1, 1]} : vector<16x16xf32> to vector<16x8xf32>
    %80 = arith.subf %78, %79 : vector<16x8xf32>
    %cst_47 = arith.constant 0.000000e+00 : f32
    %81 = vector.broadcast %cst_47 : f32 to vector<16x8xf32>
    %82 = arith.subf %81, %80 : vector<16x8xf32>
    %83 = math.exp %82 : vector<16x8xf32>
    %cst_48 = arith.constant 1.000000e+00 : f32
    %84 = vector.broadcast %cst_48 : f32 to vector<16x8xf32>
    %85 = arith.addf %84, %83 : vector<16x8xf32>
    %86 = tpu.reciprocal %85 : vector<16x8xf32> -> vector<16x8xf32>
    %cst_49 = arith.constant 1.000000e+00 : f32
    %87 = vector.broadcast %cst_49 : f32 to vector<16x8xf32>
    %88 = arith.subf %87, %86 : vector<16x8xf32>
    %89 = tpu.concatenate %86, %88 in 1 : vector<16x8xf32>, vector<16x8xf32> -> vector<16x16xf32>
    %c0_50 = arith.constant 0 : index
    %c0_51 = arith.constant 0 : index
    %90 = vector.load %arg16[%c0_50, %c0_51] : memref<16x16xf32, #tpu.memory_space<vmem>>, vector<16x16xf32>
    tpu.vector_store %arg16[%c0_50, %c0_51], %89 {strides = array<i32>} : memref<16x16xf32, #tpu.memory_space<vmem>>, vector<16x16xf32>,
    return
  }
  func.func @transform_0(%arg0: i32) -> (i32, i32) {
    %c0_i32 = arith.constant 0 : i32
    %c0_i32_0 = arith.constant 0 : i32
    return %arg0, %c0_i32 : i32, i32
  }
  func.func @transform_1(%arg0: i32) -> (i32, i32) {
    %c0_i32 = arith.constant 0 : i32
    %c0_i32_0 = arith.constant 0 : i32
    %c0_i32_1 = arith.constant 0 : i32
    return %c0_i32, %c0_i32_0 : i32, i32
  }
  func.func @transform_2(%arg0: i32) -> (i32, i32) {
    %c0_i32 = arith.constant 0 : i32
    %c0_i32_0 = arith.constant 0 : i32
    %c0_i32_1 = arith.constant 0 : i32
    return %c0_i32, %c0_i32_0 : i32, i32
  }
  func.func @transform_3(%arg0: i32) -> (i32, i32) {
    %c0_i32 = arith.constant 0 : i32
    %c0_i32_0 = arith.constant 0 : i32
    %c0_i32_1 = arith.constant 0 : i32
    return %c0_i32, %c0_i32_0 : i32, i32
  }
  func.func @transform_4(%arg0: i32) -> (i32, i32) {
    %c0_i32 = arith.constant 0 : i32
    %c0_i32_0 = arith.constant 0 : i32
    %c0_i32_1 = arith.constant 0 : i32
    return %c0_i32, %c0_i32_0 : i32, i32
  }
  func.func @transform_5(%arg0: i32) -> (i32, i32) {
    %c0_i32 = arith.constant 0 : i32
    %c0_i32_0 = arith.constant 0 : i32
    %c0_i32_1 = arith.constant 0 : i32
    return %c0_i32, %c0_i32_0 : i32, i32
  }
  func.func @transform_6(%arg0: i32) -> (i32, i32) {
    %c0_i32 = arith.constant 0 : i32
    %c0_i32_0 = arith.constant 0 : i32
    %c0_i32_1 = arith.constant 0 : i32
    return %c0_i32, %c0_i32_0 : i32, i32
  }
  func.func @transform_7(%arg0: i32) -> (i32, i32) {
    %c0_i32 = arith.constant 0 : i32
    %c0_i32_0 = arith.constant 0 : i32
    %c0_i32_1 = arith.constant 0 : i32
    return %c0_i32, %c0_i32_0 : i32, i32
  }
  func.func @transform_8(%arg0: i32) -> (i32, i32) {
    %c0_i32 = arith.constant 0 : i32
    %c0_i32_0 = arith.constant 0 : i32
    %c0_i32_1 = arith.constant 0 : i32
    return %c0_i32, %c0_i32_0 : i32, i32
  }
  func.func @transform_9(%arg0: i32) -> (i32, i32) {
    %c0_i32 = arith.constant 0 : i32
    %c0_i32_0 = arith.constant 0 : i32
    %c0_i32_1 = arith.constant 0 : i32
    return %c0_i32, %c0_i32_0 : i32, i32
  }
  func.func @transform_10(%arg0: i32) -> (i32, i32) {
    %c0_i32 = arith.constant 0 : i32
    %c0_i32_0 = arith.constant 0 : i32
    %c0_i32_1 = arith.constant 0 : i32
    return %c0_i32, %c0_i32_0 : i32, i32
  }
  func.func @transform_11(%arg0: i32) -> (i32, i32) {
    %c0_i32 = arith.constant 0 : i32
    %c0_i32_0 = arith.constant 0 : i32
    %c0_i32_1 = arith.constant 0 : i32
    return %c0_i32, %c0_i32_0 : i32, i32
  }
  func.func @transform_12(%arg0: i32) -> (i32, i32) {
    %c0_i32 = arith.constant 0 : i32
    %c0_i32_0 = arith.constant 0 : i32
    %c0_i32_1 = arith.constant 0 : i32
    return %c0_i32, %c0_i32_0 : i32, i32
  }
  func.func @transform_13(%arg0: i32) -> (i32, i32) {
    %c0_i32 = arith.constant 0 : i32
    %c0_i32_0 = arith.constant 0 : i32
    %c0_i32_1 = arith.constant 0 : i32
    return %c0_i32, %c0_i32_0 : i32, i32
  }
  func.func @transform_14(%arg0: i32) -> (i32, i32) {
    %c0_i32 = arith.constant 0 : i32
    %c0_i32_0 = arith.constant 0 : i32
    %c0_i32_1 = arith.constant 0 : i32
    return %c0_i32, %c0_i32_0 : i32, i32
  }
  func.func @transform_15(%arg0: i32) -> (i32, i32) {
    %c0_i32 = arith.constant 0 : i32
    %c0_i32_0 = arith.constant 0 : i32
    return %arg0, %c0_i32 : i32, i32
  }
}

</mosaic_0001>

<llo_original>
// kernel: mlp_mach3_forward.1
$region0: #{mlp_mach3_forward.1}
  #allocation0 [shape = 'u32[]', space=smem, size = 0x4, offset = 0x4, fixed_abs, tag = 'smem constant byte address 0x4 - core index']
  #allocation1 [shape = 'u32[72,128]{1,0:T(1,128)}', space=vmem, size = 0x9000, scoped, tag = 'internal scratch']
  %s0 = inlined_call_operand.vmem [shape: bf16[32,128], index: 0, kind: input, shape index: {}]
  %s1 = inlined_call_operand.vmem [shape: bf16[128,256], index: 1, kind: input, shape index: {}]
  %s2 = inlined_call_operand.vmem [shape: f32[1,256], index: 2, kind: input, shape index: {}]
  %s3 = inlined_call_operand.vmem [shape: bf16[256,256], index: 3, kind: input, shape index: {}]
  %s4 = inlined_call_operand.vmem [shape: f32[1,256], index: 4, kind: input, shape index: {}]
  %s5 = inlined_call_operand.vmem [shape: bf16[256,256], index: 5, kind: input, shape index: {}]
  %s6 = inlined_call_operand.vmem [shape: f32[1,256], index: 6, kind: input, shape index: {}]
  %s7 = inlined_call_operand.hbm [shape: bf16[256,256], index: 7, kind: input, shape index: {}]
  %s8 = inlined_call_operand.vmem [shape: f32[1,256], index: 8, kind: input, shape index: {}]
  %s9 = inlined_call_operand.hbm [shape: bf16[256,256], index: 9, kind: input, shape index: {}]
  %s10 = inlined_call_operand.vmem [shape: f32[1,256], index: 10, kind: input, shape index: {}]
  %s11 = inlined_call_operand.hbm [shape: bf16[256,256], index: 11, kind: input, shape index: {}]
  %s12 = inlined_call_operand.vmem [shape: f32[1,256], index: 12, kind: input, shape index: {}]
  %s13 = inlined_call_operand.vmem [shape: bf16[256,16], index: 13, kind: input, shape index: {}]
  %s14 = inlined_call_operand.vmem [shape: f32[1,16], index: 14, kind: input, shape index: {}]
  %s15 = inlined_call_operand.vmem [shape: f32[32,16], index: 15, kind: output, shape index: {}]
  %s16 = sld [smem:[#allocation0]]
  $region105: #{mlp_mach3_forward.1} parent=0
    _
  %s18 = ssub.s32 1, %s16
  %s19 = scalar_select 0, %s18, %s16
  $region1: #{mlp_mach3_forward.1} parent=0
    #allocation2 [shape = 'u8[131072]{0}', space=vmem, size = 0x20000, scoped, tag = 'input window, operand 7, single buffered']
    #allocation3 [shape = 's32[2]{0}', space=sflag, size = 0x8, scoped, tag = 'scoped memory for mlp_mach3_forward.1']
    #allocation4 [shape = 'u8[131072]{0}', space=vmem, size = 0x20000, scoped, tag = 'input window, operand 9, single buffered']
    #allocation5 [shape = 's32[1]{0}', space=sflag, size = 0x4, scoped, tag = 'scoped memory for mlp_mach3_forward.1']
    #allocation6 [shape = 'u8[131072]{0}', space=vmem, size = 0x20000, scoped, tag = 'input window, operand 11, single buffered']
    %20 = vsyncpa [#allocation3], 0
    %21 = vsyncpa [#allocation5], 0
    loop: start=0, step=1, limit=4
    $region2: #{mlp_mach3_forward.1} parent=1 // loop_pre_header
      _
    $region3: #{mlp_mach3_forward.1} parent=1 // loop_header
      %s23 = sphi 0, %s27
      %p24 = scmp.ge.s32.totalorder %s23, 4
      %s33 = sphi 0, %s35
      %s36 = sphi 0, %s33
      %s37 = sphi 0, %s36
      %s53 = sphi 0, %s37
      %s57 = sphi 0, %s57
      %s59 = sphi 0, %s57
      %s60 = sphi 0, %s59
      %s74 = sphi 0, %s60
      %s78 = sphi 0, %s78
      %s80 = sphi 0, %s78
      %s81 = sphi 0, %s80
      %s95 = sphi 0, %s81
      %s99 = sphi 0, %s99
      %s101 = sphi 0, %s99
      %s102 = sphi 0, %s101
      %s116 = sphi 0, %s102
      %s120 = sphi 0, %s120
      %s122 = sphi 0, %s120
      %s123 = sphi 0, %s122
      %s137 = sphi 0, %s123
      %s141 = sphi 0, %s141
      %s143 = sphi 0, %s141
      %s144 = sphi 0, %s143
      %s158 = sphi 0, %s144
      %s162 = sphi 0, %s162
      %s164 = sphi 0, %s162
      %s165 = sphi 0, %s164
      %s179 = sphi 0, %s165
      %s183 = sphi 0, %s183
      %s185 = sphi 0, %s183
      %s186 = sphi 0, %s185
      %s200 = sphi 0, %s186
      %s204 = sphi 0, %s204
      %s206 = sphi 0, %s204
      %s207 = sphi 0, %s206
      %s221 = sphi 0, %s207
      %s225 = sphi 0, %s225
      %s227 = sphi 0, %s225
      %s228 = sphi 0, %s227
      %s242 = sphi 0, %s228
      %s246 = sphi 0, %s246
      %s248 = sphi 0, %s246
      %s249 = sphi 0, %s248
      %s263 = sphi 0, %s249
      %s267 = sphi 0, %s267
      %s269 = sphi 0, %s267
      %s270 = sphi 0, %s269
      %s284 = sphi 0, %s270
      %s288 = sphi 0, %s288
      %s290 = sphi 0, %s288
      %s291 = sphi 0, %s290
      %s305 = sphi 0, %s291
      %s309 = sphi 0, %s309
      %s311 = sphi 0, %s309
      %s312 = sphi 0, %s311
      %s326 = sphi 0, %s312
      %s330 = sphi 0, %s330
      %s332 = sphi 0, %s330
      %s333 = sphi 0, %s332
      %s347 = sphi 0, %s333
      %s353 = sphi 0, %s355
      %s356 = sphi 0, %s353
      %s357 = sphi 0, %s356
      %s373 = sphi 0, %s357
    $region4: #{mlp_mach3_forward.1} parent=1 // loop_header_branch
      %26 = sbr.rel (%p24) target = $region8
    $region5: #{mlp_mach3_forward.1} parent=1 // loop_body
      %s28 = ssub.s32 %s23, 1
      %s29 = ssub.s32 %s23, 2
      %s30 = sadd.s32 %s23, 1
      %s31 = ssub.s32 %s23, %s30
      %p32 = scmp.eq.s32.totalorder %s31, 0
      %s34 = sadd.s32 %s33, 1
      %s35 = scalar_select %p32, %s33, %s34
      %p38 = pneg %p32
      %p39 = scmp.eq.s32.totalorder %s23, 1
      %p40 = por %p38, %p39
      %p41 = scmp.ne.s32.totalorder %s33, %s36
      %p42 = scmp.eq.s32.totalorder %s23, 0
      %p43 = por %p41, %p42
      %p44 = scmp.ne.s32.totalorder %s33, %s36
      %p45 = scmp.eq.s32.totalorder %s28, 1
      %p46 = por %p44, %p45
      %p47 = scmp.ne.s32.totalorder %s36, %s37
      %p48 = scmp.eq.s32.totalorder %s28, 0
      %p49 = por %p47, %p48
      %p50 = scmp.ne.s32.totalorder %s36, %s37
      %p51 = scmp.eq.s32.totalorder %s29, 1
      %p52 = por %p50, %p51
      %p54 = scmp.ne.s32.totalorder %s37, %s53
      %p55 = scmp.eq.s32.totalorder %s29, 0
      %p56 = por %p54, %p55
      %s58 = sadd.s32 %s57, 1
      %p61 = scmp.eq.s32.totalorder %s23, 1
      %p62 = scmp.ne.s32.totalorder %s57, %s59
      %p63 = scmp.eq.s32.totalorder %s23, 0
      %p64 = por %p62, %p63
      %p65 = scmp.ne.s32.totalorder %s57, %s59
      %p66 = scmp.eq.s32.totalorder %s28, 1
      %p67 = por %p65, %p66
      %p68 = scmp.ne.s32.totalorder %s59, %s60
      %p69 = scmp.eq.s32.totalorder %s28, 0
      %p70 = por %p68, %p69
      %p71 = scmp.ne.s32.totalorder %s59, %s60
      %p72 = scmp.eq.s32.totalorder %s29, 1
      %p73 = por %p71, %p72
      %p75 = scmp.ne.s32.totalorder %s60, %s74
      %p76 = scmp.eq.s32.totalorder %s29, 0
      %p77 = por %p75, %p76
      %s79 = sadd.s32 %s78, 1
      %p82 = scmp.eq.s32.totalorder %s23, 1
      %p83 = scmp.ne.s32.totalorder %s78, %s80
      %p84 = scmp.eq.s32.totalorder %s23, 0
      %p85 = por %p83, %p84
      %p86 = scmp.ne.s32.totalorder %s78, %s80
      %p87 = scmp.eq.s32.totalorder %s28, 1
      %p88 = por %p86, %p87
      %p89 = scmp.ne.s32.totalorder %s80, %s81
      %p90 = scmp.eq.s32.totalorder %s28, 0
      %p91 = por %p89, %p90
      %p92 = scmp.ne.s32.totalorder %s80, %s81
      %p93 = scmp.eq.s32.totalorder %s29, 1
      %p94 = por %p92, %p93
      %p96 = scmp.ne.s32.totalorder %s81, %s95
      %p97 = scmp.eq.s32.totalorder %s29, 0
      %p98 = por %p96, %p97
      %s100 = sadd.s32 %s99, 1
      %p103 = scmp.eq.s32.totalorder %s23, 1
      %p104 = scmp.ne.s32.totalorder %s99, %s101
      %p105 = scmp.eq.s32.totalorder %s23, 0
      %p106 = por %p104, %p105
      %p107 = scmp.ne.s32.totalorder %s99, %s101
      %p108 = scmp.eq.s32.totalorder %s28, 1
      %p109 = por %p107, %p108
      %p110 = scmp.ne.s32.totalorder %s101, %s102
      %p111 = scmp.eq.s32.totalorder %s28, 0
      %p112 = por %p110, %p111
      %p113 = scmp.ne.s32.totalorder %s101, %s102
      %p114 = scmp.eq.s32.totalorder %s29, 1
      %p115 = por %p113, %p114
      %p117 = scmp.ne.s32.totalorder %s102, %s116
      %p118 = scmp.eq.s32.totalorder %s29, 0
      %p119 = por %p117, %p118
      %s121 = sadd.s32 %s120, 1
      %p124 = scmp.eq.s32.totalorder %s23, 1
      %p125 = scmp.ne.s32.totalorder %s120, %s122
      %p126 = scmp.eq.s32.totalorder %s23, 0
      %p127 = por %p125, %p126
      %p128 = scmp.ne.s32.totalorder %s120, %s122
      %p129 = scmp.eq.s32.totalorder %s28, 1
      %p130 = por %p128, %p129
      %p131 = scmp.ne.s32.totalorder %s122, %s123
      %p132 = scmp.eq.s32.totalorder %s28, 0
      %p133 = por %p131, %p132
      %p134 = scmp.ne.s32.totalorder %s122, %s123
      %p135 = scmp.eq.s32.totalorder %s29, 1
      %p136 = por %p134, %p135
      %p138 = scmp.ne.s32.totalorder %s123, %s137
      %p139 = scmp.eq.s32.totalorder %s29, 0
      %p140 = por %p138, %p139
      %s142 = sadd.s32 %s141, 1
      %p145 = scmp.eq.s32.totalorder %s23, 1
      %p146 = scmp.ne.s32.totalorder %s141, %s143
      %p147 = scmp.eq.s32.totalorder %s23, 0
      %p148 = por %p146, %p147
      %p149 = scmp.ne.s32.totalorder %s141, %s143
      %p150 = scmp.eq.s32.totalorder %s28, 1
      %p151 = por %p149, %p150
      %p152 = scmp.ne.s32.totalorder %s143, %s144
      %p153 = scmp.eq.s32.totalorder %s28, 0
      %p154 = por %p152, %p153
      %p155 = scmp.ne.s32.totalorder %s143, %s144
      %p156 = scmp.eq.s32.totalorder %s29, 1
      %p157 = por %p155, %p156
      %p159 = scmp.ne.s32.totalorder %s144, %s158
      %p160 = scmp.eq.s32.totalorder %s29, 0
      %p161 = por %p159, %p160
      %s163 = sadd.s32 %s162, 1
      %p166 = scmp.eq.s32.totalorder %s23, 1
      %p167 = scmp.ne.s32.totalorder %s162, %s164
      %p168 = scmp.eq.s32.totalorder %s23, 0
      %p169 = por %p167, %p168
      %p170 = scmp.ne.s32.totalorder %s162, %s164
      %p171 = scmp.eq.s32.totalorder %s28, 1
      %p172 = por %p170, %p171
      %p173 = scmp.ne.s32.totalorder %s164, %s165
      %p174 = scmp.eq.s32.totalorder %s28, 0
      %p175 = por %p173, %p174
      %p176 = scmp.ne.s32.totalorder %s164, %s165
      %p177 = scmp.eq.s32.totalorder %s29, 1
      %p178 = por %p176, %p177
      %p180 = scmp.ne.s32.totalorder %s165, %s179
      %p181 = scmp.eq.s32.totalorder %s29, 0
      %p182 = por %p180, %p181
      %s184 = sadd.s32 %s183, 1
      %p187 = scmp.eq.s32.totalorder %s23, 1
      %p188 = scmp.ne.s32.totalorder %s183, %s185
      %p189 = scmp.eq.s32.totalorder %s23, 0
      %p190 = por %p188, %p189
      %p191 = scmp.ne.s32.totalorder %s183, %s185
      %p192 = scmp.eq.s32.totalorder %s28, 1
      %p193 = por %p191, %p192
      %p194 = scmp.ne.s32.totalorder %s185, %s186
      %p195 = scmp.eq.s32.totalorder %s28, 0
      %p196 = por %p194, %p195
      %p197 = scmp.ne.s32.totalorder %s185, %s186
      %p198 = scmp.eq.s32.totalorder %s29, 1
      %p199 = por %p197, %p198
      %p201 = scmp.ne.s32.totalorder %s186, %s200
      %p202 = scmp.eq.s32.totalorder %s29, 0
      %p203 = por %p201, %p202
      %s205 = sadd.s32 %s204, 1
      %p208 = scmp.eq.s32.totalorder %s23, 1
      %p209 = scmp.ne.s32.totalorder %s204, %s206
      %p210 = scmp.eq.s32.totalorder %s23, 0
      %p211 = por %p209, %p210
      %p212 = scmp.ne.s32.totalorder %s204, %s206
      %p213 = scmp.eq.s32.totalorder %s28, 1
      %p214 = por %p212, %p213
      %p215 = scmp.ne.s32.totalorder %s206, %s207
      %p216 = scmp.eq.s32.totalorder %s28, 0
      %p217 = por %p215, %p216
      %p218 = scmp.ne.s32.totalorder %s206, %s207
      %p219 = scmp.eq.s32.totalorder %s29, 1
      %p220 = por %p218, %p219
      %p222 = scmp.ne.s32.totalorder %s207, %s221
      %p223 = scmp.eq.s32.totalorder %s29, 0
      %p224 = por %p222, %p223
      %s226 = sadd.s32 %s225, 1
      %p229 = scmp.eq.s32.totalorder %s23, 1
      %p230 = scmp.ne.s32.totalorder %s225, %s227
      %p231 = scmp.eq.s32.totalorder %s23, 0
      %p232 = por %p230, %p231
      %p233 = scmp.ne.s32.totalorder %s225, %s227
      %p234 = scmp.eq.s32.totalorder %s28, 1
      %p235 = por %p233, %p234
      %p236 = scmp.ne.s32.totalorder %s227, %s228
      %p237 = scmp.eq.s32.totalorder %s28, 0
      %p238 = por %p236, %p237
      %p239 = scmp.ne.s32.totalorder %s227, %s228
      %p240 = scmp.eq.s32.totalorder %s29, 1
      %p241 = por %p239, %p240
      %p243 = scmp.ne.s32.totalorder %s228, %s242
      %p244 = scmp.eq.s32.totalorder %s29, 0
      %p245 = por %p243, %p244
      %s247 = sadd.s32 %s246, 1
      %p250 = scmp.eq.s32.totalorder %s23, 1
      %p251 = scmp.ne.s32.totalorder %s246, %s248
      %p252 = scmp.eq.s32.totalorder %s23, 0
      %p253 = por %p251, %p252
      %p254 = scmp.ne.s32.totalorder %s246, %s248
      %p255 = scmp.eq.s32.totalorder %s28, 1
      %p256 = por %p254, %p255
      %p257 = scmp.ne.s32.totalorder %s248, %s249
      %p258 = scmp.eq.s32.totalorder %s28, 0
      %p259 = por %p257, %p258
      %p260 = scmp.ne.s32.totalorder %s248, %s249
      %p261 = scmp.eq.s32.totalorder %s29, 1
      %p262 = por %p260, %p261
      %p264 = scmp.ne.s32.totalorder %s249, %s263
      %p265 = scmp.eq.s32.totalorder %s29, 0
      %p266 = por %p264, %p265
      %s268 = sadd.s32 %s267, 1
      %p271 = scmp.eq.s32.totalorder %s23, 1
      %p272 = scmp.ne.s32.totalorder %s267, %s269
      %p273 = scmp.eq.s32.totalorder %s23, 0
      %p274 = por %p272, %p273
      %p275 = scmp.ne.s32.totalorder %s267, %s269
      %p276 = scmp.eq.s32.totalorder %s28, 1
      %p277 = por %p275, %p276
      %p278 = scmp.ne.s32.totalorder %s269, %s270
      %p279 = scmp.eq.s32.totalorder %s28, 0
      %p280 = por %p278, %p279
      %p281 = scmp.ne.s32.totalorder %s269, %s270
      %p282 = scmp.eq.s32.totalorder %s29, 1
      %p283 = por %p281, %p282
      %p285 = scmp.ne.s32.totalorder %s270, %s284
      %p286 = scmp.eq.s32.totalorder %s29, 0
      %p287 = por %p285, %p286
      %s289 = sadd.s32 %s288, 1
      %p292 = scmp.eq.s32.totalorder %s23, 1
      %p293 = scmp.ne.s32.totalorder %s288, %s290
      %p294 = scmp.eq.s32.totalorder %s23, 0
      %p295 = por %p293, %p294
      %p296 = scmp.ne.s32.totalorder %s288, %s290
      %p297 = scmp.eq.s32.totalorder %s28, 1
      %p298 = por %p296, %p297
      %p299 = scmp.ne.s32.totalorder %s290, %s291
      %p300 = scmp.eq.s32.totalorder %s28, 0
      %p301 = por %p299, %p300
      %p302 = scmp.ne.s32.totalorder %s290, %s291
      %p303 = scmp.eq.s32.totalorder %s29, 1
      %p304 = por %p302, %p303
      %p306 = scmp.ne.s32.totalorder %s291, %s305
      %p307 = scmp.eq.s32.totalorder %s29, 0
      %p308 = por %p306, %p307
      %s310 = sadd.s32 %s309, 1
      %p313 = scmp.eq.s32.totalorder %s23, 1
      %p314 = scmp.ne.s32.totalorder %s309, %s311
      %p315 = scmp.eq.s32.totalorder %s23, 0
      %p316 = por %p314, %p315
      %p317 = scmp.ne.s32.totalorder %s309, %s311
      %p318 = scmp.eq.s32.totalorder %s28, 1
      %p319 = por %p317, %p318
      %p320 = scmp.ne.s32.totalorder %s311, %s312
      %p321 = scmp.eq.s32.totalorder %s28, 0
      %p322 = por %p320, %p321
      %p323 = scmp.ne.s32.totalorder %s311, %s312
      %p324 = scmp.eq.s32.totalorder %s29, 1
      %p325 = por %p323, %p324
      %p327 = scmp.ne.s32.totalorder %s312, %s326
      %p328 = scmp.eq.s32.totalorder %s29, 0
      %p329 = por %p327, %p328
      %s331 = sadd.s32 %s330, 1
      %p334 = scmp.eq.s32.totalorder %s23, 1
      %p335 = scmp.ne.s32.totalorder %s330, %s332
      %p336 = scmp.eq.s32.totalorder %s23, 0
      %p337 = por %p335, %p336
      %p338 = scmp.ne.s32.totalorder %s330, %s332
      %p339 = scmp.eq.s32.totalorder %s28, 1
      %p340 = por %p338, %p339
      %p341 = scmp.ne.s32.totalorder %s332, %s333
      %p342 = scmp.eq.s32.totalorder %s28, 0
      %p343 = por %p341, %p342
      %p344 = scmp.ne.s32.totalorder %s332, %s333
      %p345 = scmp.eq.s32.totalorder %s29, 1
      %p346 = por %p344, %p345
      %p348 = scmp.ne.s32.totalorder %s333, %s347
      %p349 = scmp.eq.s32.totalorder %s29, 0
      %p350 = por %p348, %p349
      %s351 = ssub.s32 %s23, %s30
      %p352 = scmp.eq.s32.totalorder %s351, 0
      %s354 = sadd.s32 %s353, 1
      %s355 = scalar_select %p352, %s353, %s354
      %p358 = pneg %p352
      %p359 = scmp.eq.s32.totalorder %s23, 1
      %p360 = por %p358, %p359
      %p361 = scmp.ne.s32.totalorder %s353, %s356
      %p362 = scmp.eq.s32.totalorder %s23, 0
      %p363 = por %p361, %p362
      %p364 = scmp.ne.s32.totalorder %s353, %s356
      %p365 = scmp.eq.s32.totalorder %s28, 1
      %p366 = por %p364, %p365
      %p367 = scmp.ne.s32.totalorder %s356, %s357
      %p368 = scmp.eq.s32.totalorder %s28, 0
      %p369 = por %p367, %p368
      %p370 = scmp.ne.s32.totalorder %s356, %s357
      %p371 = scmp.eq.s32.totalorder %s29, 1
      %p372 = por %p370, %p371
      %p374 = scmp.ne.s32.totalorder %s357, %s373
      %p375 = scmp.eq.s32.totalorder %s29, 0
      %p376 = por %p374, %p375
      %p377 = scmp.le.s32.totalorder 1, %s23
      %p378 = scmp.lt.s32.totalorder %s23, 3
      %p379 = pnand %p377, %p378
      %p380 = pneg %p379
      // Predicated region
      $region9: #{mlp_mach3_forward.1} parent=5 // pred_check
        _
      $region10: #{mlp_mach3_forward.1} parent=5 // pred_check_branch
        %382 = sbr.rel (%p379) target = $region12
      $region11: #{mlp_mach3_forward.1} parent=5 // pred_region
        %s383 = ssub.s32 %s23, 1
        // Predicated region
        $region13: #{mlp_mach3_forward.1} parent=11 // pred_check
          %p384 = pneg %p70
        $region14: #{mlp_mach3_forward.1} parent=11 // pred_check_branch
          %386 = sbr.rel (%p384) target = $region16
        $region15: #{mlp_mach3_forward.1} parent=11 // pred_region
          _
        $region16: #{mlp_mach3_forward.1} parent=11 // pred_fallthru
          _
        // Predicated region
        $region17: #{mlp_mach3_forward.1} parent=11 // pred_check
          %p387 = pneg %p91
        $region18: #{mlp_mach3_forward.1} parent=11 // pred_check_branch
          %389 = sbr.rel (%p387) target = $region20
        $region19: #{mlp_mach3_forward.1} parent=11 // pred_region
          _
        $region20: #{mlp_mach3_forward.1} parent=11 // pred_fallthru
          _
        // Predicated region
        $region21: #{mlp_mach3_forward.1} parent=11 // pred_check
          %p390 = pneg %p112
        $region22: #{mlp_mach3_forward.1} parent=11 // pred_check_branch
          %392 = sbr.rel (%p390) target = $region24
        $region23: #{mlp_mach3_forward.1} parent=11 // pred_region
          _
        $region24: #{mlp_mach3_forward.1} parent=11 // pred_fallthru
          _
        // Predicated region
        $region25: #{mlp_mach3_forward.1} parent=11 // pred_check
          %p393 = pneg %p133
        $region26: #{mlp_mach3_forward.1} parent=11 // pred_check_branch
          %395 = sbr.rel (%p393) target = $region28
        $region27: #{mlp_mach3_forward.1} parent=11 // pred_region
          _
        $region28: #{mlp_mach3_forward.1} parent=11 // pred_fallthru
          _
        // Predicated region
        $region29: #{mlp_mach3_forward.1} parent=11 // pred_check
          %p396 = pneg %p154
        $region30: #{mlp_mach3_forward.1} parent=11 // pred_check_branch
          %398 = sbr.rel (%p396) target = $region32
        $region31: #{mlp_mach3_forward.1} parent=11 // pred_region
          _
        $region32: #{mlp_mach3_forward.1} parent=11 // pred_fallthru
          _
        // Predicated region
        $region33: #{mlp_mach3_forward.1} parent=11 // pred_check
          %p399 = pneg %p175
        $region34: #{mlp_mach3_forward.1} parent=11 // pred_check_branch
          %401 = sbr.rel (%p399) target = $region36
        $region35: #{mlp_mach3_forward.1} parent=11 // pred_region
          _
        $region36: #{mlp_mach3_forward.1} parent=11 // pred_fallthru
          _
        // Predicated region
        $region37: #{mlp_mach3_forward.1} parent=11 // pred_check
          %p402 = pneg %p196
        $region38: #{mlp_mach3_forward.1} parent=11 // pred_check_branch
          %404 = sbr.rel (%p402) target = $region40
        $region39: #{mlp_mach3_forward.1} parent=11 // pred_region
          %406 = vsyncadd [#allocation3], 0
          %s407 = sshll.u32 %s7, 4
          %s408 = int_to_ptr.hbm [resolvable:$true] %s407
          %s409 = sshll.u32 [#allocation2], 4
          %s410 = int_to_ptr.vmem [resolvable:$true] %s409
          %415 = dma.hbm_to_vmem [thread:$0]  %s408, 4096, %s410, [#allocation3], 128, 128, 8
        $region40: #{mlp_mach3_forward.1} parent=11 // pred_fallthru
          _
        // Predicated region
        $region41: #{mlp_mach3_forward.1} parent=11 // pred_check
          %p416 = pneg %p217
        $region42: #{mlp_mach3_forward.1} parent=11 // pred_check_branch
          %418 = sbr.rel (%p416) target = $region44
        $region43: #{mlp_mach3_forward.1} parent=11 // pred_region
          _
        $region44: #{mlp_mach3_forward.1} parent=11 // pred_fallthru
          _
        // Predicated region
        $region45: #{mlp_mach3_forward.1} parent=11 // pred_check
          %p419 = pneg %p238
        $region46: #{mlp_mach3_forward.1} parent=11 // pred_check_branch
          %421 = sbr.rel (%p419) target = $region48
        $region47: #{mlp_mach3_forward.1} parent=11 // pred_region
          %423 = vsyncadd [#allocation5], 0
          %s424 = sshll.u32 %s9, 4
          %s425 = int_to_ptr.hbm [resolvable:$true] %s424
          %s426 = sshll.u32 [#allocation4], 4
          %s427 = int_to_ptr.vmem [resolvable:$true] %s426
          %432 = dma.hbm_to_vmem [thread:$0]  %s425, 4096, %s427, [#allocation5], 128, 128, 8
        $region48: #{mlp_mach3_forward.1} parent=11 // pred_fallthru
          _
        // Predicated region
        $region49: #{mlp_mach3_forward.1} parent=11 // pred_check
          %p433 = pneg %p259
        $region50: #{mlp_mach3_forward.1} parent=11 // pred_check_branch
          %435 = sbr.rel (%p433) target = $region52
        $region51: #{mlp_mach3_forward.1} parent=11 // pred_region
          _
        $region52: #{mlp_mach3_forward.1} parent=11 // pred_fallthru
          _
        // Predicated region
        $region53: #{mlp_mach3_forward.1} parent=11 // pred_check
          %p436 = pneg %p280
        $region54: #{mlp_mach3_forward.1} parent=11 // pred_check_branch
          %438 = sbr.rel (%p436) target = $region56
        $region55: #{mlp_mach3_forward.1} parent=11 // pred_region
          %440 = vsyncadd [#allocation5], 0
          %s441 = sshll.u32 %s11, 4
          %s442 = int_to_ptr.hbm [resolvable:$true] %s441
          %s443 = sshll.u32 [#allocation6], 4
          %s444 = int_to_ptr.vmem [resolvable:$true] %s443
          %449 = dma.hbm_to_vmem [thread:$0]  %s442, 4096, %s444, [#allocation5], 128, 128, 8
        $region56: #{mlp_mach3_forward.1} parent=11 // pred_fallthru
          _
        // Predicated region
        $region57: #{mlp_mach3_forward.1} parent=11 // pred_check
          %p450 = pneg %p301
        $region58: #{mlp_mach3_forward.1} parent=11 // pred_check_branch
          %452 = sbr.rel (%p450) target = $region60
        $region59: #{mlp_mach3_forward.1} parent=11 // pred_region
          _
        $region60: #{mlp_mach3_forward.1} parent=11 // pred_fallthru
          _
        // Predicated region
        $region61: #{mlp_mach3_forward.1} parent=11 // pred_check
          %p453 = pneg %p322
        $region62: #{mlp_mach3_forward.1} parent=11 // pred_check_branch
          %455 = sbr.rel (%p453) target = $region64
        $region63: #{mlp_mach3_forward.1} parent=11 // pred_region
          _
        $region64: #{mlp_mach3_forward.1} parent=11 // pred_fallthru
          _
        // Predicated region
        $region65: #{mlp_mach3_forward.1} parent=11 // pred_check
          %p456 = pneg %p343
        $region66: #{mlp_mach3_forward.1} parent=11 // pred_check_branch
          %458 = sbr.rel (%p456) target = $region68
        $region67: #{mlp_mach3_forward.1} parent=11 // pred_region
          _
        $region68: #{mlp_mach3_forward.1} parent=11 // pred_fallthru
          _
      $region12: #{mlp_mach3_forward.1} parent=5 // pred_fallthru
        _
      %p459 = scmp.lt.s32.totalorder %s23, 2
      // Predicated region
      $region69: #{mlp_mach3_forward.1} parent=5 // pred_check
        %p460 = pneg %p459
      $region70: #{mlp_mach3_forward.1} parent=5 // pred_check_branch
        %462 = sbr.rel (%p460) target = $region72
      $region71: #{mlp_mach3_forward.1} parent=5 // pred_region
        // Predicated region
        $region73: #{mlp_mach3_forward.1} parent=71 // pred_check
          %p463 = pneg %p43
        $region74: #{mlp_mach3_forward.1} parent=71 // pred_check_branch
          %465 = sbr.rel (%p463) target = $region76
        $region75: #{mlp_mach3_forward.1} parent=71 // pred_region
          %s466 = smul.u32 2, %s23
          %p467 = scmp.lt.s32.totalorder %s466, 3
          %s468 = scalar_select %p467, %s466, 3
          %s469 = smul.addr %s468, 4
          %s470 = scalar_lea.vmem %s0, %s469
          %s471 = smul.u32 2, %s23
        $region76: #{mlp_mach3_forward.1} parent=71 // pred_fallthru
          _
      $region72: #{mlp_mach3_forward.1} parent=5 // pred_fallthru
        _
      %p472 = scmp.le.s32.totalorder 1, %s23
      %p473 = scmp.lt.s32.totalorder %s23, 3
      %p474 = pnand %p472, %p473
      %p475 = pneg %p474
      // Predicated region
      $region77: #{mlp_mach3_forward.1} parent=5 // pred_check
        _
      $region78: #{mlp_mach3_forward.1} parent=5 // pred_check_branch
        %477 = sbr.rel (%p474) target = $region80
      $region79: #{mlp_mach3_forward.1} parent=5 // pred_region
        %s478 = ssub.s32 %s23, 1
        // Predicated region
        $region81: #{mlp_mach3_forward.1} parent=79 // pred_check
          %p479 = pneg %p196
        $region82: #{mlp_mach3_forward.1} parent=79 // pred_check_branch
          %481 = sbr.rel (%p479) target = $region84
        $region83: #{mlp_mach3_forward.1} parent=79 // pred_region
          %483 = dma.done [#allocation3], 4096
        $region84: #{mlp_mach3_forward.1} parent=79 // pred_fallthru
          _
        // Predicated region
        $region85: #{mlp_mach3_forward.1} parent=79 // pred_check
          %p484 = pneg %p238
        $region86: #{mlp_mach3_forward.1} parent=79 // pred_check_branch
          %486 = sbr.rel (%p484) target = $region88
        $region87: #{mlp_mach3_forward.1} parent=79 // pred_region
          %488 = dma.done [#allocation5], 4096
        $region88: #{mlp_mach3_forward.1} parent=79 // pred_fallthru
          _
        // Predicated region
        $region89: #{mlp_mach3_forward.1} parent=79 // pred_check
          %p489 = pneg %p280
        $region90: #{mlp_mach3_forward.1} parent=79 // pred_check_branch
          %491 = sbr.rel (%p489) target = $region92
        $region91: #{mlp_mach3_forward.1} parent=79 // pred_region
          %493 = dma.done [#allocation5], 4096
        $region92: #{mlp_mach3_forward.1} parent=79 // pred_fallthru
          _
        %s494 = smul.u32 2, %s28
        %p495 = scmp.lt.s32.totalorder %s494, 3
        %s496 = scalar_select %p495, %s494, 3
        %s497 = smul.addr %s496, 4
        %s498 = scalar_lea.vmem %s0, %s497
        %p499 = pneg %p49
        %p500 = pneg %p46
        %p501 = pneg %p70
        %p502 = pneg %p67
        %p503 = pneg %p91
        %p504 = pneg %p88
        %p505 = pneg %p112
        %p506 = pneg %p109
        %p507 = pneg %p133
        %p508 = pneg %p130
        %p509 = pneg %p154
        %p510 = pneg %p151
        %p511 = pneg %p175
        %p512 = pneg %p172
        %p513 = pneg %p196
        %p514 = pneg %p193
        %p515 = pneg %p217
        %p516 = pneg %p214
        %p517 = pneg %p238
        %p518 = pneg %p235
        %p519 = pneg %p259
        %p520 = pneg %p256
        %p521 = pneg %p280
        %p522 = pneg %p277
        %p523 = pneg %p301
        %p524 = pneg %p298
        %p525 = pneg %p322
        %p526 = pneg %p319
        %p527 = pneg %p343
        %p528 = pneg %p340
        %p529 = pneg %p369
        %p530 = pneg %p366
        %s531 = smul.u32 2, %s28
        %p532 = scmp.lt.s32.totalorder %s531, 3
        %s533 = scalar_select %p532, %s531, 3
        %s534 = smul.addr %s533, 8
        %s535 = scalar_lea.vmem %s15, %s534
        %s536 = smul.u32 2, %s28
        %p537 = scmp.lt.s32.totalorder %s536, 3
        %s538 = scalar_select %p537, %s536, 3
        %s539 = smul.addr %s538, 4
        %s540 = scalar_lea.vmem %s0, %s539
        %s541 = smul.u32 2, %s28
        %s542 = smul.u32 2, %s28
        %p543 = scmp.lt.s32.totalorder %s542, 3
        %s544 = scalar_select %p543, %s542, 3
        %s545 = smul.addr %s544, 8
        %s546 = scalar_lea.vmem %s15, %s545
        %s547 = smul.u32 2, %s28
        %v548 = vld [vmem:[%s540] sm:$0xf]
        %v549 = vld [vmem:[%s540 + $0x4] sm:$0xf]
        %v550 = vld [vmem:[%s1] sm:$0xff]
        %v551 = vld [vmem:[%s1 + $0x8] sm:$0xff]
        %v552 = vld [vmem:[%s1 + $0x10] sm:$0xff]
        %v553 = vld [vmem:[%s1 + $0x18] sm:$0xff]
        %v554 = vld [vmem:[%s1 + $0x20] sm:$0xff]
        %v555 = vld [vmem:[%s1 + $0x28] sm:$0xff]
        %v556 = vld [vmem:[%s1 + $0x30] sm:$0xff]
        %v557 = vld [vmem:[%s1 + $0x38] sm:$0xff]
        %v558 = vld [vmem:[%s1 + $0x40] sm:$0xff]
        %v559 = vld [vmem:[%s1 + $0x48] sm:$0xff]
        %v560 = vld [vmem:[%s1 + $0x50] sm:$0xff]
        %v561 = vld [vmem:[%s1 + $0x58] sm:$0xff]
        %v562 = vld [vmem:[%s1 + $0x60] sm:$0xff]
        %v563 = vld [vmem:[%s1 + $0x68] sm:$0xff]
        %v564 = vld [vmem:[%s1 + $0x70] sm:$0xff]
        %v565 = vld [vmem:[%s1 + $0x78] sm:$0xff]
        %v568 = vunpack.c.l.b16 %v548
        %v569 = vunpack.c.l.b16 %v549
        %v570 = vpack.c.b16 %v569, %v568
        %v588 = vunpack.c.l.b16 %v550
        %v589 = vunpack.c.h.b16 %v550
        %v590 = vunpack.c.l.b16 %v551
        %v591 = vunpack.c.h.b16 %v551
        %v592 = vunpack.c.l.b16 %v552
        %v593 = vunpack.c.h.b16 %v552
        %v594 = vunpack.c.l.b16 %v553
        %v595 = vunpack.c.h.b16 %v553
        %v596 = vunpack.c.l.b16 %v554
        %v597 = vunpack.c.h.b16 %v554
        %v598 = vunpack.c.l.b16 %v555
        %v599 = vunpack.c.h.b16 %v555
        %v600 = vunpack.c.l.b16 %v556
        %v601 = vunpack.c.h.b16 %v556
        %v602 = vunpack.c.l.b16 %v557
        %v603 = vunpack.c.h.b16 %v557
        %v604 = vunpack.c.l.b16 %v558
        %v605 = vunpack.c.h.b16 %v558
        %v606 = vunpack.c.l.b16 %v559
        %v607 = vunpack.c.h.b16 %v559
        %v608 = vunpack.c.l.b16 %v560
        %v609 = vunpack.c.h.b16 %v560
        %v610 = vunpack.c.l.b16 %v561
        %v611 = vunpack.c.h.b16 %v561
        %v612 = vunpack.c.l.b16 %v562
        %v613 = vunpack.c.h.b16 %v562
        %v614 = vunpack.c.l.b16 %v563
        %v615 = vunpack.c.h.b16 %v563
        %v616 = vunpack.c.l.b16 %v564
        %v617 = vunpack.c.h.b16 %v564
        %v618 = vunpack.c.l.b16 %v565
        %v619 = vunpack.c.h.b16 %v565
        %v620 = vpack.c.b16 %v590, %v588
        %v621 = vpack.c.b16 %v591, %v589
        %v622 = vpack.c.b16 %v594, %v592
        %v623 = vpack.c.b16 %v595, %v593
        %v624 = vpack.c.b16 %v598, %v596
        %v625 = vpack.c.b16 %v599, %v597
        %v626 = vpack.c.b16 %v602, %v600
        %v627 = vpack.c.b16 %v603, %v601
        %v628 = vpack.c.b16 %v606, %v604
        %v629 = vpack.c.b16 %v607, %v605
        %v630 = vpack.c.b16 %v610, %v608
        %v631 = vpack.c.b16 %v611, %v609
        %v632 = vpack.c.b16 %v614, %v612
        %v633 = vpack.c.b16 %v615, %v613
        %v634 = vpack.c.b16 %v618, %v616
        %v635 = vpack.c.b16 %v619, %v617
        %652 = vmatpush.bf16.msra.mxu0 %v634
        %653 = vmatpush.bf16.msra.mxu0 %v632
        %654 = vmatpush.bf16.msra.mxu0 %v630
        %655 = vmatpush.bf16.msra.mxu0 %v628
        %656 = vmatpush.bf16.msra.mxu0 %v626
        %657 = vmatpush.bf16.msra.mxu0 %v624
        %658 = vmatpush.bf16.msra.mxu0 %v622
        %659 = vmatpush.bf16.msra.mxu0 %v620
        %660 = vmatmul.bf16.gmra.mxu0 %v570
        %v661 = vpop.f32.mrf.mxu0
        %v662 = vadd.f32 0.0, %v661
        %v663 = vpop.f32.mrf.mxu0
        %v664 = vadd.f32 0.0, %v663
        %665 = vdwg.mxu0
        %666 = vmatpush.bf16.msra.mxu0 %v635
        %667 = vmatpush.bf16.msra.mxu0 %v633
        %668 = vmatpush.bf16.msra.mxu0 %v631
        %669 = vmatpush.bf16.msra.mxu0 %v629
        %670 = vmatpush.bf16.msra.mxu0 %v627
        %671 = vmatpush.bf16.msra.mxu0 %v625
        %672 = vmatpush.bf16.msra.mxu0 %v623
        %673 = vmatpush.bf16.msra.mxu0 %v621
        %674 = vmatmul.bf16.gmra.mxu0 %v570
        %v675 = vpop.f32.mrf.mxu0
        %v676 = vadd.f32 0.0, %v675
        %v677 = vpop.f32.mrf.mxu0
        %v678 = vadd.f32 0.0, %v677
        %679 = vdwg.mxu0
        %v680 = vpack.c.bf16 %v676, %v662
        %v681 = vpack.c.bf16 %v678, %v664
        %v682 = vld [vmem:[%s2] sm:$0x3]
        %v684 = vperm.slane %v682, 0
        %v685 = vperm.slane %v682, 1
        %v688 = vpack.c.bf16 %v685, %v684
        %v690 = vunpack.c.l.b16 %v688
        %v691 = vunpack.c.h.b16 %v688
        %v692 = vpack.c.b16 %v690, %v690
        %v693 = vpack.c.b16 %v691, %v691
        %v695 = vpack.i.b16 %v692, %v692
        %v697 = vperm.slane %v695, 0
        %v699 = vpack.i.b16 %v693, %v693
        %v701 = vperm.slane %v699, 0
        %v702 = vunpack.c.l.bf16 %v680
        %v703 = vunpack.c.h.bf16 %v680
        %v704 = vunpack.c.l.bf16 %v681
        %v705 = vunpack.c.h.bf16 %v681
        %v706 = vunpack.c.l.bf16 %v697
        %v707 = vunpack.c.l.bf16 %v701
        %v708 = vadd.f32 %v702, %v706
        %v709 = vadd.f32 %v703, %v707
        %v710 = vadd.f32 %v704, %v706
        %v711 = vadd.f32 %v705, %v707
        %v712 = vpack.c.bf16 %v709, %v708
        %v713 = vpack.c.bf16 %v711, %v710
        %v714 = vunpack.c.l.bf16 %v712
        %v715 = vunpack.c.h.bf16 %v712
        %v716 = vunpack.c.l.bf16 %v713
        %v717 = vunpack.c.h.bf16 %v713
        %vm718 = vcmp.gt.f32.partialorder %v714, 0.0
        %vm719 = vcmp.gt.f32.partialorder %v715, 0.0
        %vm720 = vcmp.gt.f32.partialorder %v716, 0.0
        %vm721 = vcmp.gt.f32.partialorder %v717, 0.0
        %v722 = vmul.f32 %v714, 0.010009766
        %v723 = vmul.f32 %v715, 0.010009766
        %v724 = vmul.f32 %v716, 0.010009766
        %v725 = vmul.f32 %v717, 0.010009766
        %v726 = vpack.c.bf16 %v723, %v722
        %v727 = vpack.c.bf16 %v725, %v724
        %vm728 = vmpackc.low %vm719, %vm718
        %vm729 = vmpackc.low %vm721, %vm720
        %v730 = vsel %vm728, %v712, %v726
        %v731 = vsel %vm729, %v713, %v727
        %v732 = vld [vmem:[%s3] sm:$0xff]
        %v733 = vld [vmem:[%s3 + $0x8] sm:$0xff]
        %v734 = vld [vmem:[%s3 + $0x10] sm:$0xff]
        %v735 = vld [vmem:[%s3 + $0x18] sm:$0xff]
        %v736 = vld [vmem:[%s3 + $0x20] sm:$0xff]
        %v737 = vld [vmem:[%s3 + $0x28] sm:$0xff]
        %v738 = vld [vmem:[%s3 + $0x30] sm:$0xff]
        %v739 = vld [vmem:[%s3 + $0x38] sm:$0xff]
        %v740 = vld [vmem:[%s3 + $0x40] sm:$0xff]
        %v741 = vld [vmem:[%s3 + $0x48] sm:$0xff]
        %v742 = vld [vmem:[%s3 + $0x50] sm:$0xff]
        %v743 = vld [vmem:[%s3 + $0x58] sm:$0xff]
        %v744 = vld [vmem:[%s3 + $0x60] sm:$0xff]
        %v745 = vld [vmem:[%s3 + $0x68] sm:$0xff]
        %v746 = vld [vmem:[%s3 + $0x70] sm:$0xff]
        %v747 = vld [vmem:[%s3 + $0x78] sm:$0xff]
        %v748 = vld [vmem:[%s3 + $0x80] sm:$0xff]
        %v749 = vld [vmem:[%s3 + $0x88] sm:$0xff]
        %v750 = vld [vmem:[%s3 + $0x90] sm:$0xff]
        %v751 = vld [vmem:[%s3 + $0x98] sm:$0xff]
        %v752 = vld [vmem:[%s3 + $0xa0] sm:$0xff]
        %v753 = vld [vmem:[%s3 + $0xa8] sm:$0xff]
        %v754 = vld [vmem:[%s3 + $0xb0] sm:$0xff]
        %v755 = vld [vmem:[%s3 + $0xb8] sm:$0xff]
        %v756 = vld [vmem:[%s3 + $0xc0] sm:$0xff]
        %v757 = vld [vmem:[%s3 + $0xc8] sm:$0xff]
        %v758 = vld [vmem:[%s3 + $0xd0] sm:$0xff]
        %v759 = vld [vmem:[%s3 + $0xd8] sm:$0xff]
        %v760 = vld [vmem:[%s3 + $0xe0] sm:$0xff]
        %v761 = vld [vmem:[%s3 + $0xe8] sm:$0xff]
        %v762 = vld [vmem:[%s3 + $0xf0] sm:$0xff]
        %v763 = vld [vmem:[%s3 + $0xf8] sm:$0xff]
        %v766 = vunpack.c.l.b16 %v730
        %v767 = vunpack.c.h.b16 %v730
        %v768 = vunpack.c.l.b16 %v731
        %v769 = vunpack.c.h.b16 %v731
        %v770 = vpack.c.b16 %v768, %v766
        %v771 = vpack.c.b16 %v769, %v767
        %v806 = vunpack.c.l.b16 %v732
        %v807 = vunpack.c.h.b16 %v732
        %v808 = vunpack.c.l.b16 %v733
        %v809 = vunpack.c.h.b16 %v733
        %v810 = vunpack.c.l.b16 %v734
        %v811 = vunpack.c.h.b16 %v734
        %v812 = vunpack.c.l.b16 %v735
        %v813 = vunpack.c.h.b16 %v735
        %v814 = vunpack.c.l.b16 %v736
        %v815 = vunpack.c.h.b16 %v736
        %v816 = vunpack.c.l.b16 %v737
        %v817 = vunpack.c.h.b16 %v737
        %v818 = vunpack.c.l.b16 %v738
        %v819 = vunpack.c.h.b16 %v738
        %v820 = vunpack.c.l.b16 %v739
        %v821 = vunpack.c.h.b16 %v739
        %v822 = vunpack.c.l.b16 %v740
        %v823 = vunpack.c.h.b16 %v740
        %v824 = vunpack.c.l.b16 %v741
        %v825 = vunpack.c.h.b16 %v741
        %v826 = vunpack.c.l.b16 %v742
        %v827 = vunpack.c.h.b16 %v742
        %v828 = vunpack.c.l.b16 %v743
        %v829 = vunpack.c.h.b16 %v743
        %v830 = vunpack.c.l.b16 %v744
        %v831 = vunpack.c.h.b16 %v744
        %v832 = vunpack.c.l.b16 %v745
        %v833 = vunpack.c.h.b16 %v745
        %v834 = vunpack.c.l.b16 %v746
        %v835 = vunpack.c.h.b16 %v746
        %v836 = vunpack.c.l.b16 %v747
        %v837 = vunpack.c.h.b16 %v747
        %v838 = vunpack.c.l.b16 %v748
        %v839 = vunpack.c.h.b16 %v748
        %v840 = vunpack.c.l.b16 %v749
        %v841 = vunpack.c.h.b16 %v749
        %v842 = vunpack.c.l.b16 %v750
        %v843 = vunpack.c.h.b16 %v750
        %v844 = vunpack.c.l.b16 %v751
        %v845 = vunpack.c.h.b16 %v751
        %v846 = vunpack.c.l.b16 %v752
        %v847 = vunpack.c.h.b16 %v752
        %v848 = vunpack.c.l.b16 %v753
        %v849 = vunpack.c.h.b16 %v753
        %v850 = vunpack.c.l.b16 %v754
        %v851 = vunpack.c.h.b16 %v754
        %v852 = vunpack.c.l.b16 %v755
        %v853 = vunpack.c.h.b16 %v755
        %v854 = vunpack.c.l.b16 %v756
        %v855 = vunpack.c.h.b16 %v756
        %v856 = vunpack.c.l.b16 %v757
        %v857 = vunpack.c.h.b16 %v757
        %v858 = vunpack.c.l.b16 %v758
        %v859 = vunpack.c.h.b16 %v758
        %v860 = vunpack.c.l.b16 %v759
        %v861 = vunpack.c.h.b16 %v759
        %v862 = vunpack.c.l.b16 %v760
        %v863 = vunpack.c.h.b16 %v760
        %v864 = vunpack.c.l.b16 %v761
        %v865 = vunpack.c.h.b16 %v761
        %v866 = vunpack.c.l.b16 %v762
        %v867 = vunpack.c.h.b16 %v762
        %v868 = vunpack.c.l.b16 %v763
        %v869 = vunpack.c.h.b16 %v763
        %v870 = vpack.c.b16 %v808, %v806
        %v871 = vpack.c.b16 %v809, %v807
        %v872 = vpack.c.b16 %v812, %v810
        %v873 = vpack.c.b16 %v813, %v811
        %v874 = vpack.c.b16 %v816, %v814
        %v875 = vpack.c.b16 %v817, %v815
        %v876 = vpack.c.b16 %v820, %v818
        %v877 = vpack.c.b16 %v821, %v819
        %v878 = vpack.c.b16 %v824, %v822
        %v879 = vpack.c.b16 %v825, %v823
        %v880 = vpack.c.b16 %v828, %v826
        %v881 = vpack.c.b16 %v829, %v827
        %v882 = vpack.c.b16 %v832, %v830
        %v883 = vpack.c.b16 %v833, %v831
        %v884 = vpack.c.b16 %v836, %v834
        %v885 = vpack.c.b16 %v837, %v835
        %v886 = vpack.c.b16 %v840, %v838
        %v887 = vpack.c.b16 %v841, %v839
        %v888 = vpack.c.b16 %v844, %v842
        %v889 = vpack.c.b16 %v845, %v843
        %v890 = vpack.c.b16 %v848, %v846
        %v891 = vpack.c.b16 %v849, %v847
        %v892 = vpack.c.b16 %v852, %v850
        %v893 = vpack.c.b16 %v853, %v851
        %v894 = vpack.c.b16 %v856, %v854
        %v895 = vpack.c.b16 %v857, %v855
        %v896 = vpack.c.b16 %v860, %v858
        %v897 = vpack.c.b16 %v861, %v859
        %v898 = vpack.c.b16 %v864, %v862
        %v899 = vpack.c.b16 %v865, %v863
        %v900 = vpack.c.b16 %v868, %v866
        %v901 = vpack.c.b16 %v869, %v867
        %934 = vmatpush.bf16.msra.mxu0 %v884
        %935 = vmatpush.bf16.msra.mxu0 %v882
        %936 = vmatpush.bf16.msra.mxu0 %v880
        %937 = vmatpush.bf16.msra.mxu0 %v878
        %938 = vmatpush.bf16.msra.mxu0 %v876
        %939 = vmatpush.bf16.msra.mxu0 %v874
        %940 = vmatpush.bf16.msra.mxu0 %v872
        %941 = vmatpush.bf16.msra.mxu0 %v870
        %942 = vmatmul.bf16.gmra.mxu0 %v770
        %v943 = vpop.f32.mrf.mxu0
        %v944 = vadd.f32 0.0, %v943
        %v945 = vpop.f32.mrf.mxu0
        %v946 = vadd.f32 0.0, %v945
        %947 = vdwg.mxu0
        %948 = vmatpush.bf16.msra.mxu0 %v900
        %949 = vmatpush.bf16.msra.mxu0 %v898
        %950 = vmatpush.bf16.msra.mxu0 %v896
        %951 = vmatpush.bf16.msra.mxu0 %v894
        %952 = vmatpush.bf16.msra.mxu0 %v892
        %953 = vmatpush.bf16.msra.mxu0 %v890
        %954 = vmatpush.bf16.msra.mxu0 %v888
        %955 = vmatpush.bf16.msra.mxu0 %v886
        %956 = vmatmul.bf16.gmra.mxu0 %v771
        %v957 = vpop.f32.mrf.mxu0
        %v958 = vadd.f32 %v944, %v957
        %v959 = vpop.f32.mrf.mxu0
        %v960 = vadd.f32 %v946, %v959
        %961 = vdwg.mxu0
        %962 = vmatpush.bf16.msra.mxu0 %v885
        %963 = vmatpush.bf16.msra.mxu0 %v883
        %964 = vmatpush.bf16.msra.mxu0 %v881
        %965 = vmatpush.bf16.msra.mxu0 %v879
        %966 = vmatpush.bf16.msra.mxu0 %v877
        %967 = vmatpush.bf16.msra.mxu0 %v875
        %968 = vmatpush.bf16.msra.mxu0 %v873
        %969 = vmatpush.bf16.msra.mxu0 %v871
        %970 = vmatmul.bf16.gmra.mxu0 %v770
        %v971 = vpop.f32.mrf.mxu0
        %v972 = vadd.f32 0.0, %v971
        %v973 = vpop.f32.mrf.mxu0
        %v974 = vadd.f32 0.0, %v973
        %975 = vdwg.mxu0
        %976 = vmatpush.bf16.msra.mxu0 %v901
        %977 = vmatpush.bf16.msra.mxu0 %v899
        %978 = vmatpush.bf16.msra.mxu0 %v897
        %979 = vmatpush.bf16.msra.mxu0 %v895
        %980 = vmatpush.bf16.msra.mxu0 %v893
        %981 = vmatpush.bf16.msra.mxu0 %v891
        %982 = vmatpush.bf16.msra.mxu0 %v889
        %983 = vmatpush.bf16.msra.mxu0 %v887
        %984 = vmatmul.bf16.gmra.mxu0 %v771
        %v985 = vpop.f32.mrf.mxu0
        %v986 = vadd.f32 %v972, %v985
        %v987 = vpop.f32.mrf.mxu0
        %v988 = vadd.f32 %v974, %v987
        %989 = vdwg.mxu0
        %v990 = vpack.c.bf16 %v986, %v958
        %v991 = vpack.c.bf16 %v988, %v960
        %v992 = vld [vmem:[%s4] sm:$0x3]
        %v994 = vperm.slane %v992, 0
        %v995 = vperm.slane %v992, 1
        %v998 = vpack.c.bf16 %v995, %v994
        %v1000 = vunpack.c.l.b16 %v998
        %v1001 = vunpack.c.h.b16 %v998
        %v1002 = vpack.c.b16 %v1000, %v1000
        %v1003 = vpack.c.b16 %v1001, %v1001
        %v1005 = vpack.i.b16 %v1002, %v1002
        %v1007 = vperm.slane %v1005, 0
        %v1009 = vpack.i.b16 %v1003, %v1003
        %v1011 = vperm.slane %v1009, 0
        %v1012 = vunpack.c.l.bf16 %v990
        %v1013 = vunpack.c.h.bf16 %v990
        %v1014 = vunpack.c.l.bf16 %v991
        %v1015 = vunpack.c.h.bf16 %v991
        %v1016 = vunpack.c.l.bf16 %v1007
        %v1017 = vunpack.c.l.bf16 %v1011
        %v1018 = vadd.f32 %v1012, %v1016
        %v1019 = vadd.f32 %v1013, %v1017
        %v1020 = vadd.f32 %v1014, %v1016
        %v1021 = vadd.f32 %v1015, %v1017
        %v1022 = vpack.c.bf16 %v1019, %v1018
        %v1023 = vpack.c.bf16 %v1021, %v1020
        %v1024 = vunpack.c.l.bf16 %v1022
        %v1025 = vunpack.c.h.bf16 %v1022
        %v1026 = vunpack.c.l.bf16 %v1023
        %v1027 = vunpack.c.h.bf16 %v1023
        %vm1028 = vcmp.gt.f32.partialorder %v1024, 0.0
        %vm1029 = vcmp.gt.f32.partialorder %v1025, 0.0
        %vm1030 = vcmp.gt.f32.partialorder %v1026, 0.0
        %vm1031 = vcmp.gt.f32.partialorder %v1027, 0.0
        %v1032 = vmul.f32 %v1024, 0.010009766
        %v1033 = vmul.f32 %v1025, 0.010009766
        %v1034 = vmul.f32 %v1026, 0.010009766
        %v1035 = vmul.f32 %v1027, 0.010009766
        %v1036 = vpack.c.bf16 %v1033, %v1032
        %v1037 = vpack.c.bf16 %v1035, %v1034
        %vm1038 = vmpackc.low %vm1029, %vm1028
        %vm1039 = vmpackc.low %vm1031, %vm1030
        %v1040 = vsel %vm1038, %v1022, %v1036
        %v1041 = vsel %vm1039, %v1023, %v1037
        %v1042 = vld [vmem:[%s5] sm:$0xff]
        %v1043 = vld [vmem:[%s5 + $0x8] sm:$0xff]
        %v1044 = vld [vmem:[%s5 + $0x10] sm:$0xff]
        %v1045 = vld [vmem:[%s5 + $0x18] sm:$0xff]
        %v1046 = vld [vmem:[%s5 + $0x20] sm:$0xff]
        %v1047 = vld [vmem:[%s5 + $0x28] sm:$0xff]
        %v1048 = vld [vmem:[%s5 + $0x30] sm:$0xff]
        %v1049 = vld [vmem:[%s5 + $0x38] sm:$0xff]
        %v1050 = vld [vmem:[%s5 + $0x40] sm:$0xff]
        %v1051 = vld [vmem:[%s5 + $0x48] sm:$0xff]
        %v1052 = vld [vmem:[%s5 + $0x50] sm:$0xff]
        %v1053 = vld [vmem:[%s5 + $0x58] sm:$0xff]
        %v1054 = vld [vmem:[%s5 + $0x60] sm:$0xff]
        %v1055 = vld [vmem:[%s5 + $0x68] sm:$0xff]
        %v1056 = vld [vmem:[%s5 + $0x70] sm:$0xff]
        %v1057 = vld [vmem:[%s5 + $0x78] sm:$0xff]
        %v1058 = vld [vmem:[%s5 + $0x80] sm:$0xff]
        %v1059 = vld [vmem:[%s5 + $0x88] sm:$0xff]
        %v1060 = vld [vmem:[%s5 + $0x90] sm:$0xff]
        %v1061 = vld [vmem:[%s5 + $0x98] sm:$0xff]
        %v1062 = vld [vmem:[%s5 + $0xa0] sm:$0xff]
        %v1063 = vld [vmem:[%s5 + $0xa8] sm:$0xff]
        %v1064 = vld [vmem:[%s5 + $0xb0] sm:$0xff]
        %v1065 = vld [vmem:[%s5 + $0xb8] sm:$0xff]
        %v1066 = vld [vmem:[%s5 + $0xc0] sm:$0xff]
        %v1067 = vld [vmem:[%s5 + $0xc8] sm:$0xff]
        %v1068 = vld [vmem:[%s5 + $0xd0] sm:$0xff]
        %v1069 = vld [vmem:[%s5 + $0xd8] sm:$0xff]
        %v1070 = vld [vmem:[%s5 + $0xe0] sm:$0xff]
        %v1071 = vld [vmem:[%s5 + $0xe8] sm:$0xff]
        %v1072 = vld [vmem:[%s5 + $0xf0] sm:$0xff]
        %v1073 = vld [vmem:[%s5 + $0xf8] sm:$0xff]
        %v1076 = vunpack.c.l.b16 %v1040
        %v1077 = vunpack.c.h.b16 %v1040
        %v1078 = vunpack.c.l.b16 %v1041
        %v1079 = vunpack.c.h.b16 %v1041
        %v1080 = vpack.c.b16 %v1078, %v1076
        %v1081 = vpack.c.b16 %v1079, %v1077
        %v1116 = vunpack.c.l.b16 %v1042
        %v1117 = vunpack.c.h.b16 %v1042
        %v1118 = vunpack.c.l.b16 %v1043
        %v1119 = vunpack.c.h.b16 %v1043
        %v1120 = vunpack.c.l.b16 %v1044
        %v1121 = vunpack.c.h.b16 %v1044
        %v1122 = vunpack.c.l.b16 %v1045
        %v1123 = vunpack.c.h.b16 %v1045
        %v1124 = vunpack.c.l.b16 %v1046
        %v1125 = vunpack.c.h.b16 %v1046
        %v1126 = vunpack.c.l.b16 %v1047
        %v1127 = vunpack.c.h.b16 %v1047
        %v1128 = vunpack.c.l.b16 %v1048
        %v1129 = vunpack.c.h.b16 %v1048
        %v1130 = vunpack.c.l.b16 %v1049
        %v1131 = vunpack.c.h.b16 %v1049
        %v1132 = vunpack.c.l.b16 %v1050
        %v1133 = vunpack.c.h.b16 %v1050
        %v1134 = vunpack.c.l.b16 %v1051
        %v1135 = vunpack.c.h.b16 %v1051
        %v1136 = vunpack.c.l.b16 %v1052
        %v1137 = vunpack.c.h.b16 %v1052
        %v1138 = vunpack.c.l.b16 %v1053
        %v1139 = vunpack.c.h.b16 %v1053
        %v1140 = vunpack.c.l.b16 %v1054
        %v1141 = vunpack.c.h.b16 %v1054
        %v1142 = vunpack.c.l.b16 %v1055
        %v1143 = vunpack.c.h.b16 %v1055
        %v1144 = vunpack.c.l.b16 %v1056
        %v1145 = vunpack.c.h.b16 %v1056
        %v1146 = vunpack.c.l.b16 %v1057
        %v1147 = vunpack.c.h.b16 %v1057
        %v1148 = vunpack.c.l.b16 %v1058
        %v1149 = vunpack.c.h.b16 %v1058
        %v1150 = vunpack.c.l.b16 %v1059
        %v1151 = vunpack.c.h.b16 %v1059
        %v1152 = vunpack.c.l.b16 %v1060
        %v1153 = vunpack.c.h.b16 %v1060
        %v1154 = vunpack.c.l.b16 %v1061
        %v1155 = vunpack.c.h.b16 %v1061
        %v1156 = vunpack.c.l.b16 %v1062
        %v1157 = vunpack.c.h.b16 %v1062
        %v1158 = vunpack.c.l.b16 %v1063
        %v1159 = vunpack.c.h.b16 %v1063
        %v1160 = vunpack.c.l.b16 %v1064
        %v1161 = vunpack.c.h.b16 %v1064
        %v1162 = vunpack.c.l.b16 %v1065
        %v1163 = vunpack.c.h.b16 %v1065
        %v1164 = vunpack.c.l.b16 %v1066
        %v1165 = vunpack.c.h.b16 %v1066
        %v1166 = vunpack.c.l.b16 %v1067
        %v1167 = vunpack.c.h.b16 %v1067
        %v1168 = vunpack.c.l.b16 %v1068
        %v1169 = vunpack.c.h.b16 %v1068
        %v1170 = vunpack.c.l.b16 %v1069
        %v1171 = vunpack.c.h.b16 %v1069
        %v1172 = vunpack.c.l.b16 %v1070
        %v1173 = vunpack.c.h.b16 %v1070
        %v1174 = vunpack.c.l.b16 %v1071
        %v1175 = vunpack.c.h.b16 %v1071
        %v1176 = vunpack.c.l.b16 %v1072
        %v1177 = vunpack.c.h.b16 %v1072
        %v1178 = vunpack.c.l.b16 %v1073
        %v1179 = vunpack.c.h.b16 %v1073
        %v1180 = vpack.c.b16 %v1118, %v1116
        %v1181 = vpack.c.b16 %v1119, %v1117
        %v1182 = vpack.c.b16 %v1122, %v1120
        %v1183 = vpack.c.b16 %v1123, %v1121
        %v1184 = vpack.c.b16 %v1126, %v1124
        %v1185 = vpack.c.b16 %v1127, %v1125
        %v1186 = vpack.c.b16 %v1130, %v1128
        %v1187 = vpack.c.b16 %v1131, %v1129
        %v1188 = vpack.c.b16 %v1134, %v1132
        %v1189 = vpack.c.b16 %v1135, %v1133
        %v1190 = vpack.c.b16 %v1138, %v1136
        %v1191 = vpack.c.b16 %v1139, %v1137
        %v1192 = vpack.c.b16 %v1142, %v1140
        %v1193 = vpack.c.b16 %v1143, %v1141
        %v1194 = vpack.c.b16 %v1146, %v1144
        %v1195 = vpack.c.b16 %v1147, %v1145
        %v1196 = vpack.c.b16 %v1150, %v1148
        %v1197 = vpack.c.b16 %v1151, %v1149
        %v1198 = vpack.c.b16 %v1154, %v1152
        %v1199 = vpack.c.b16 %v1155, %v1153
        %v1200 = vpack.c.b16 %v1158, %v1156
        %v1201 = vpack.c.b16 %v1159, %v1157
        %v1202 = vpack.c.b16 %v1162, %v1160
        %v1203 = vpack.c.b16 %v1163, %v1161
        %v1204 = vpack.c.b16 %v1166, %v1164
        %v1205 = vpack.c.b16 %v1167, %v1165
        %v1206 = vpack.c.b16 %v1170, %v1168
        %v1207 = vpack.c.b16 %v1171, %v1169
        %v1208 = vpack.c.b16 %v1174, %v1172
        %v1209 = vpack.c.b16 %v1175, %v1173
        %v1210 = vpack.c.b16 %v1178, %v1176
        %v1211 = vpack.c.b16 %v1179, %v1177
        %1244 = vmatpush.bf16.msra.mxu0 %v1194
        %1245 = vmatpush.bf16.msra.mxu0 %v1192
        %1246 = vmatpush.bf16.msra.mxu0 %v1190
        %1247 = vmatpush.bf16.msra.mxu0 %v1188
        %1248 = vmatpush.bf16.msra.mxu0 %v1186
        %1249 = vmatpush.bf16.msra.mxu0 %v1184
        %1250 = vmatpush.bf16.msra.mxu0 %v1182
        %1251 = vmatpush.bf16.msra.mxu0 %v1180
        %1252 = vmatmul.bf16.gmra.mxu0 %v1080
        %v1253 = vpop.f32.mrf.mxu0
        %v1254 = vadd.f32 0.0, %v1253
        %v1255 = vpop.f32.mrf.mxu0
        %v1256 = vadd.f32 0.0, %v1255
        %1257 = vdwg.mxu0
        %1258 = vmatpush.bf16.msra.mxu0 %v1210
        %1259 = vmatpush.bf16.msra.mxu0 %v1208
        %1260 = vmatpush.bf16.msra.mxu0 %v1206
        %1261 = vmatpush.bf16.msra.mxu0 %v1204
        %1262 = vmatpush.bf16.msra.mxu0 %v1202
        %1263 = vmatpush.bf16.msra.mxu0 %v1200
        %1264 = vmatpush.bf16.msra.mxu0 %v1198
        %1265 = vmatpush.bf16.msra.mxu0 %v1196
        %1266 = vmatmul.bf16.gmra.mxu0 %v1081
        %v1267 = vpop.f32.mrf.mxu0
        %v1268 = vadd.f32 %v1254, %v1267
        %v1269 = vpop.f32.mrf.mxu0
        %v1270 = vadd.f32 %v1256, %v1269
        %1271 = vdwg.mxu0
        %1272 = vmatpush.bf16.msra.mxu0 %v1195
        %1273 = vmatpush.bf16.msra.mxu0 %v1193
        %1274 = vmatpush.bf16.msra.mxu0 %v1191
        %1275 = vmatpush.bf16.msra.mxu0 %v1189
        %1276 = vmatpush.bf16.msra.mxu0 %v1187
        %1277 = vmatpush.bf16.msra.mxu0 %v1185
        %1278 = vmatpush.bf16.msra.mxu0 %v1183
        %1279 = vmatpush.bf16.msra.mxu0 %v1181
        %1280 = vmatmul.bf16.gmra.mxu0 %v1080
        %v1281 = vpop.f32.mrf.mxu0
        %v1282 = vadd.f32 0.0, %v1281
        %v1283 = vpop.f32.mrf.mxu0
        %v1284 = vadd.f32 0.0, %v1283
        %1285 = vdwg.mxu0
        %1286 = vmatpush.bf16.msra.mxu0 %v1211
        %1287 = vmatpush.bf16.msra.mxu0 %v1209
        %1288 = vmatpush.bf16.msra.mxu0 %v1207
        %1289 = vmatpush.bf16.msra.mxu0 %v1205
        %1290 = vmatpush.bf16.msra.mxu0 %v1203
        %1291 = vmatpush.bf16.msra.mxu0 %v1201
        %1292 = vmatpush.bf16.msra.mxu0 %v1199
        %1293 = vmatpush.bf16.msra.mxu0 %v1197
        %1294 = vmatmul.bf16.gmra.mxu0 %v1081
        %v1295 = vpop.f32.mrf.mxu0
        %v1296 = vadd.f32 %v1282, %v1295
        %v1297 = vpop.f32.mrf.mxu0
        %v1298 = vadd.f32 %v1284, %v1297
        %1299 = vdwg.mxu0
        %v1300 = vpack.c.bf16 %v1296, %v1268
        %v1301 = vpack.c.bf16 %v1298, %v1270
        %v1302 = vld [vmem:[%s6] sm:$0x3]
        %v1304 = vperm.slane %v1302, 0
        %v1305 = vperm.slane %v1302, 1
        %v1308 = vpack.c.bf16 %v1305, %v1304
        %v1310 = vunpack.c.l.b16 %v1308
        %v1311 = vunpack.c.h.b16 %v1308
        %v1312 = vpack.c.b16 %v1310, %v1310
        %v1313 = vpack.c.b16 %v1311, %v1311
        %v1315 = vpack.i.b16 %v1312, %v1312
        %v1317 = vperm.slane %v1315, 0
        %v1319 = vpack.i.b16 %v1313, %v1313
        %v1321 = vperm.slane %v1319, 0
        %v1322 = vunpack.c.l.bf16 %v1300
        %v1323 = vunpack.c.h.bf16 %v1300
        %v1324 = vunpack.c.l.bf16 %v1301
        %v1325 = vunpack.c.h.bf16 %v1301
        %v1326 = vunpack.c.l.bf16 %v1317
        %v1327 = vunpack.c.l.bf16 %v1321
        %v1328 = vadd.f32 %v1322, %v1326
        %v1329 = vadd.f32 %v1323, %v1327
        %v1330 = vadd.f32 %v1324, %v1326
        %v1331 = vadd.f32 %v1325, %v1327
        %v1332 = vpack.c.bf16 %v1329, %v1328
        %v1333 = vpack.c.bf16 %v1331, %v1330
        %v1334 = vunpack.c.l.bf16 %v1332
        %v1335 = vunpack.c.h.bf16 %v1332
        %v1336 = vunpack.c.l.bf16 %v1333
        %v1337 = vunpack.c.h.bf16 %v1333
        %vm1338 = vcmp.gt.f32.partialorder %v1334, 0.0
        %vm1339 = vcmp.gt.f32.partialorder %v1335, 0.0
        %vm1340 = vcmp.gt.f32.partialorder %v1336, 0.0
        %vm1341 = vcmp.gt.f32.partialorder %v1337, 0.0
        %v1342 = vmul.f32 %v1334, 0.010009766
        %v1343 = vmul.f32 %v1335, 0.010009766
        %v1344 = vmul.f32 %v1336, 0.010009766
        %v1345 = vmul.f32 %v1337, 0.010009766
        %v1346 = vpack.c.bf16 %v1343, %v1342
        %v1347 = vpack.c.bf16 %v1345, %v1344
        %vm1348 = vmpackc.low %vm1339, %vm1338
        %vm1349 = vmpackc.low %vm1341, %vm1340
        %v1350 = vsel %vm1348, %v1332, %v1346
        %v1351 = vsel %vm1349, %v1333, %v1347
        %v1352 = vld [vmem:[#allocation2] sm:$0xff]
        %v1353 = vld [vmem:[#allocation2 + $0x8] sm:$0xff]
        %v1354 = vld [vmem:[#allocation2 + $0x10] sm:$0xff]
        %v1355 = vld [vmem:[#allocation2 + $0x18] sm:$0xff]
        %v1356 = vld [vmem:[#allocation2 + $0x20] sm:$0xff]
        %v1357 = vld [vmem:[#allocation2 + $0x28] sm:$0xff]
        %v1358 = vld [vmem:[#allocation2 + $0x30] sm:$0xff]
        %v1359 = vld [vmem:[#allocation2 + $0x38] sm:$0xff]
        %v1360 = vld [vmem:[#allocation2 + $0x40] sm:$0xff]
        %v1361 = vld [vmem:[#allocation2 + $0x48] sm:$0xff]
        %v1362 = vld [vmem:[#allocation2 + $0x50] sm:$0xff]
        %v1363 = vld [vmem:[#allocation2 + $0x58] sm:$0xff]
        %v1364 = vld [vmem:[#allocation2 + $0x60] sm:$0xff]
        %v1365 = vld [vmem:[#allocation2 + $0x68] sm:$0xff]
        %v1366 = vld [vmem:[#allocation2 + $0x70] sm:$0xff]
        %v1367 = vld [vmem:[#allocation2 + $0x78] sm:$0xff]
        %v1368 = vld [vmem:[#allocation2 + $0x80] sm:$0xff]
        %v1369 = vld [vmem:[#allocation2 + $0x88] sm:$0xff]
        %v1370 = vld [vmem:[#allocation2 + $0x90] sm:$0xff]
        %v1371 = vld [vmem:[#allocation2 + $0x98] sm:$0xff]
        %v1372 = vld [vmem:[#allocation2 + $0xa0] sm:$0xff]
        %v1373 = vld [vmem:[#allocation2 + $0xa8] sm:$0xff]
        %v1374 = vld [vmem:[#allocation2 + $0xb0] sm:$0xff]
        %v1375 = vld [vmem:[#allocation2 + $0xb8] sm:$0xff]
        %v1376 = vld [vmem:[#allocation2 + $0xc0] sm:$0xff]
        %v1377 = vld [vmem:[#allocation2 + $0xc8] sm:$0xff]
        %v1378 = vld [vmem:[#allocation2 + $0xd0] sm:$0xff]
        %v1379 = vld [vmem:[#allocation2 + $0xd8] sm:$0xff]
        %v1380 = vld [vmem:[#allocation2 + $0xe0] sm:$0xff]
        %v1381 = vld [vmem:[#allocation2 + $0xe8] sm:$0xff]
        %v1382 = vld [vmem:[#allocation2 + $0xf0] sm:$0xff]
        %v1383 = vld [vmem:[#allocation2 + $0xf8] sm:$0xff]
        %v1386 = vunpack.c.l.b16 %v1350
        %v1387 = vunpack.c.h.b16 %v1350
        %v1388 = vunpack.c.l.b16 %v1351
        %v1389 = vunpack.c.h.b16 %v1351
        %v1390 = vpack.c.b16 %v1388, %v1386
        %v1391 = vpack.c.b16 %v1389, %v1387
        %v1426 = vunpack.c.l.b16 %v1352
        %v1427 = vunpack.c.h.b16 %v1352
        %v1428 = vunpack.c.l.b16 %v1353
        %v1429 = vunpack.c.h.b16 %v1353
        %v1430 = vunpack.c.l.b16 %v1354
        %v1431 = vunpack.c.h.b16 %v1354
        %v1432 = vunpack.c.l.b16 %v1355
        %v1433 = vunpack.c.h.b16 %v1355
        %v1434 = vunpack.c.l.b16 %v1356
        %v1435 = vunpack.c.h.b16 %v1356
        %v1436 = vunpack.c.l.b16 %v1357
        %v1437 = vunpack.c.h.b16 %v1357
        %v1438 = vunpack.c.l.b16 %v1358
        %v1439 = vunpack.c.h.b16 %v1358
        %v1440 = vunpack.c.l.b16 %v1359
        %v1441 = vunpack.c.h.b16 %v1359
        %v1442 = vunpack.c.l.b16 %v1360
        %v1443 = vunpack.c.h.b16 %v1360
        %v1444 = vunpack.c.l.b16 %v1361
        %v1445 = vunpack.c.h.b16 %v1361
        %v1446 = vunpack.c.l.b16 %v1362
        %v1447 = vunpack.c.h.b16 %v1362
        %v1448 = vunpack.c.l.b16 %v1363
        %v1449 = vunpack.c.h.b16 %v1363
        %v1450 = vunpack.c.l.b16 %v1364
        %v1451 = vunpack.c.h.b16 %v1364
        %v1452 = vunpack.c.l.b16 %v1365
        %v1453 = vunpack.c.h.b16 %v1365
        %v1454 = vunpack.c.l.b16 %v1366
        %v1455 = vunpack.c.h.b16 %v1366
        %v1456 = vunpack.c.l.b16 %v1367
        %v1457 = vunpack.c.h.b16 %v1367
        %v1458 = vunpack.c.l.b16 %v1368
        %v1459 = vunpack.c.h.b16 %v1368
        %v1460 = vunpack.c.l.b16 %v1369
        %v1461 = vunpack.c.h.b16 %v1369
        %v1462 = vunpack.c.l.b16 %v1370
        %v1463 = vunpack.c.h.b16 %v1370
        %v1464 = vunpack.c.l.b16 %v1371
        %v1465 = vunpack.c.h.b16 %v1371
        %v1466 = vunpack.c.l.b16 %v1372
        %v1467 = vunpack.c.h.b16 %v1372
        %v1468 = vunpack.c.l.b16 %v1373
        %v1469 = vunpack.c.h.b16 %v1373
        %v1470 = vunpack.c.l.b16 %v1374
        %v1471 = vunpack.c.h.b16 %v1374
        %v1472 = vunpack.c.l.b16 %v1375
        %v1473 = vunpack.c.h.b16 %v1375
        %v1474 = vunpack.c.l.b16 %v1376
        %v1475 = vunpack.c.h.b16 %v1376
        %v1476 = vunpack.c.l.b16 %v1377
        %v1477 = vunpack.c.h.b16 %v1377
        %v1478 = vunpack.c.l.b16 %v1378
        %v1479 = vunpack.c.h.b16 %v1378
        %v1480 = vunpack.c.l.b16 %v1379
        %v1481 = vunpack.c.h.b16 %v1379
        %v1482 = vunpack.c.l.b16 %v1380
        %v1483 = vunpack.c.h.b16 %v1380
        %v1484 = vunpack.c.l.b16 %v1381
        %v1485 = vunpack.c.h.b16 %v1381
        %v1486 = vunpack.c.l.b16 %v1382
        %v1487 = vunpack.c.h.b16 %v1382
        %v1488 = vunpack.c.l.b16 %v1383
        %v1489 = vunpack.c.h.b16 %v1383
        %v1490 = vpack.c.b16 %v1428, %v1426
        %v1491 = vpack.c.b16 %v1429, %v1427
        %v1492 = vpack.c.b16 %v1432, %v1430
        %v1493 = vpack.c.b16 %v1433, %v1431
        %v1494 = vpack.c.b16 %v1436, %v1434
        %v1495 = vpack.c.b16 %v1437, %v1435
        %v1496 = vpack.c.b16 %v1440, %v1438
        %v1497 = vpack.c.b16 %v1441, %v1439
        %v1498 = vpack.c.b16 %v1444, %v1442
        %v1499 = vpack.c.b16 %v1445, %v1443
        %v1500 = vpack.c.b16 %v1448, %v1446
        %v1501 = vpack.c.b16 %v1449, %v1447
        %v1502 = vpack.c.b16 %v1452, %v1450
        %v1503 = vpack.c.b16 %v1453, %v1451
        %v1504 = vpack.c.b16 %v1456, %v1454
        %v1505 = vpack.c.b16 %v1457, %v1455
        %v1506 = vpack.c.b16 %v1460, %v1458
        %v1507 = vpack.c.b16 %v1461, %v1459
        %v1508 = vpack.c.b16 %v1464, %v1462
        %v1509 = vpack.c.b16 %v1465, %v1463
        %v1510 = vpack.c.b16 %v1468, %v1466
        %v1511 = vpack.c.b16 %v1469, %v1467
        %v1512 = vpack.c.b16 %v1472, %v1470
        %v1513 = vpack.c.b16 %v1473, %v1471
        %v1514 = vpack.c.b16 %v1476, %v1474
        %v1515 = vpack.c.b16 %v1477, %v1475
        %v1516 = vpack.c.b16 %v1480, %v1478
        %v1517 = vpack.c.b16 %v1481, %v1479
        %v1518 = vpack.c.b16 %v1484, %v1482
        %v1519 = vpack.c.b16 %v1485, %v1483
        %v1520 = vpack.c.b16 %v1488, %v1486
        %v1521 = vpack.c.b16 %v1489, %v1487
        %1554 = vmatpush.bf16.msra.mxu0 %v1504
        %1555 = vmatpush.bf16.msra.mxu0 %v1502
        %1556 = vmatpush.bf16.msra.mxu0 %v1500
        %1557 = vmatpush.bf16.msra.mxu0 %v1498
        %1558 = vmatpush.bf16.msra.mxu0 %v1496
        %1559 = vmatpush.bf16.msra.mxu0 %v1494
        %1560 = vmatpush.bf16.msra.mxu0 %v1492
        %1561 = vmatpush.bf16.msra.mxu0 %v1490
        %1562 = vmatmul.bf16.gmra.mxu0 %v1390
        %v1563 = vpop.f32.mrf.mxu0
        %v1564 = vadd.f32 0.0, %v1563
        %v1565 = vpop.f32.mrf.mxu0
        %v1566 = vadd.f32 0.0, %v1565
        %1567 = vdwg.mxu0
        %1568 = vmatpush.bf16.msra.mxu0 %v1520
        %1569 = vmatpush.bf16.msra.mxu0 %v1518
        %1570 = vmatpush.bf16.msra.mxu0 %v1516
        %1571 = vmatpush.bf16.msra.mxu0 %v1514
        %1572 = vmatpush.bf16.msra.mxu0 %v1512
        %1573 = vmatpush.bf16.msra.mxu0 %v1510
        %1574 = vmatpush.bf16.msra.mxu0 %v1508
        %1575 = vmatpush.bf16.msra.mxu0 %v1506
        %1576 = vmatmul.bf16.gmra.mxu0 %v1391
        %v1577 = vpop.f32.mrf.mxu0
        %v1578 = vadd.f32 %v1564, %v1577
        %v1579 = vpop.f32.mrf.mxu0
        %v1580 = vadd.f32 %v1566, %v1579
        %1581 = vdwg.mxu0
        %1582 = vmatpush.bf16.msra.mxu0 %v1505
        %1583 = vmatpush.bf16.msra.mxu0 %v1503
        %1584 = vmatpush.bf16.msra.mxu0 %v1501
        %1585 = vmatpush.bf16.msra.mxu0 %v1499
        %1586 = vmatpush.bf16.msra.mxu0 %v1497
        %1587 = vmatpush.bf16.msra.mxu0 %v1495
        %1588 = vmatpush.bf16.msra.mxu0 %v1493
        %1589 = vmatpush.bf16.msra.mxu0 %v1491
        %1590 = vmatmul.bf16.gmra.mxu0 %v1390
        %v1591 = vpop.f32.mrf.mxu0
        %v1592 = vadd.f32 0.0, %v1591
        %v1593 = vpop.f32.mrf.mxu0
        %v1594 = vadd.f32 0.0, %v1593
        %1595 = vdwg.mxu0
        %1596 = vmatpush.bf16.msra.mxu0 %v1521
        %1597 = vmatpush.bf16.msra.mxu0 %v1519
        %1598 = vmatpush.bf16.msra.mxu0 %v1517
        %1599 = vmatpush.bf16.msra.mxu0 %v1515
        %1600 = vmatpush.bf16.msra.mxu0 %v1513
        %1601 = vmatpush.bf16.msra.mxu0 %v1511
        %1602 = vmatpush.bf16.msra.mxu0 %v1509
        %1603 = vmatpush.bf16.msra.mxu0 %v1507
        %1604 = vmatmul.bf16.gmra.mxu0 %v1391
        %v1605 = vpop.f32.mrf.mxu0
        %v1606 = vadd.f32 %v1592, %v1605
        %v1607 = vpop.f32.mrf.mxu0
        %v1608 = vadd.f32 %v1594, %v1607
        %1609 = vdwg.mxu0
        %v1610 = vpack.c.bf16 %v1606, %v1578
        %v1611 = vpack.c.bf16 %v1608, %v1580
        %v1612 = vld [vmem:[%s8] sm:$0x3]
        %v1614 = vperm.slane %v1612, 0
        %v1615 = vperm.slane %v1612, 1
        %v1618 = vpack.c.bf16 %v1615, %v1614
        %v1620 = vunpack.c.l.b16 %v1618
        %v1621 = vunpack.c.h.b16 %v1618
        %v1622 = vpack.c.b16 %v1620, %v1620
        %v1623 = vpack.c.b16 %v1621, %v1621
        %v1625 = vpack.i.b16 %v1622, %v1622
        %v1627 = vperm.slane %v1625, 0
        %v1629 = vpack.i.b16 %v1623, %v1623
        %v1631 = vperm.slane %v1629, 0
        %v1632 = vunpack.c.l.bf16 %v1610
        %v1633 = vunpack.c.h.bf16 %v1610
        %v1634 = vunpack.c.l.bf16 %v1611
        %v1635 = vunpack.c.h.bf16 %v1611
        %v1636 = vunpack.c.l.bf16 %v1627
        %v1637 = vunpack.c.l.bf16 %v1631
        %v1638 = vadd.f32 %v1632, %v1636
        %v1639 = vadd.f32 %v1633, %v1637
        %v1640 = vadd.f32 %v1634, %v1636
        %v1641 = vadd.f32 %v1635, %v1637
        %v1642 = vpack.c.bf16 %v1639, %v1638
        %v1643 = vpack.c.bf16 %v1641, %v1640
        %v1644 = vunpack.c.l.bf16 %v1642
        %v1645 = vunpack.c.h.bf16 %v1642
        %v1646 = vunpack.c.l.bf16 %v1643
        %v1647 = vunpack.c.h.bf16 %v1643
        %vm1648 = vcmp.gt.f32.partialorder %v1644, 0.0
        %vm1649 = vcmp.gt.f32.partialorder %v1645, 0.0
        %vm1650 = vcmp.gt.f32.partialorder %v1646, 0.0
        %vm1651 = vcmp.gt.f32.partialorder %v1647, 0.0
        %v1652 = vmul.f32 %v1644, 0.010009766
        %v1653 = vmul.f32 %v1645, 0.010009766
        %v1654 = vmul.f32 %v1646, 0.010009766
        %v1655 = vmul.f32 %v1647, 0.010009766
        %v1656 = vpack.c.bf16 %v1653, %v1652
        %v1657 = vpack.c.bf16 %v1655, %v1654
        %vm1658 = vmpackc.low %vm1649, %vm1648
        %vm1659 = vmpackc.low %vm1651, %vm1650
        %v1660 = vsel %vm1658, %v1642, %v1656
        %v1661 = vsel %vm1659, %v1643, %v1657
        %v1662 = vld [vmem:[#allocation4] sm:$0xff]
        %v1663 = vld [vmem:[#allocation4 + $0x8] sm:$0xff]
        %v1664 = vld [vmem:[#allocation4 + $0x10] sm:$0xff]
        %v1665 = vld [vmem:[#allocation4 + $0x18] sm:$0xff]
        %v1666 = vld [vmem:[#allocation4 + $0x20] sm:$0xff]
        %v1667 = vld [vmem:[#allocation4 + $0x28] sm:$0xff]
        %v1668 = vld [vmem:[#allocation4 + $0x30] sm:$0xff]
        %v1669 = vld [vmem:[#allocation4 + $0x38] sm:$0xff]
        %v1670 = vld [vmem:[#allocation4 + $0x40] sm:$0xff]
        %v1671 = vld [vmem:[#allocation4 + $0x48] sm:$0xff]
        %v1672 = vld [vmem:[#allocation4 + $0x50] sm:$0xff]
        %v1673 = vld [vmem:[#allocation4 + $0x58] sm:$0xff]
        %v1674 = vld [vmem:[#allocation4 + $0x60] sm:$0xff]
        %v1675 = vld [vmem:[#allocation4 + $0x68] sm:$0xff]
        %v1676 = vld [vmem:[#allocation4 + $0x70] sm:$0xff]
        %v1677 = vld [vmem:[#allocation4 + $0x78] sm:$0xff]
        %v1678 = vld [vmem:[#allocation4 + $0x80] sm:$0xff]
        %v1679 = vld [vmem:[#allocation4 + $0x88] sm:$0xff]
        %v1680 = vld [vmem:[#allocation4 + $0x90] sm:$0xff]
        %v1681 = vld [vmem:[#allocation4 + $0x98] sm:$0xff]
        %v1682 = vld [vmem:[#allocation4 + $0xa0] sm:$0xff]
        %v1683 = vld [vmem:[#allocation4 + $0xa8] sm:$0xff]
        %v1684 = vld [vmem:[#allocation4 + $0xb0] sm:$0xff]
        %v1685 = vld [vmem:[#allocation4 + $0xb8] sm:$0xff]
        %v1686 = vld [vmem:[#allocation4 + $0xc0] sm:$0xff]
        %v1687 = vld [vmem:[#allocation4 + $0xc8] sm:$0xff]
        %v1688 = vld [vmem:[#allocation4 + $0xd0] sm:$0xff]
        %v1689 = vld [vmem:[#allocation4 + $0xd8] sm:$0xff]
        %v1690 = vld [vmem:[#allocation4 + $0xe0] sm:$0xff]
        %v1691 = vld [vmem:[#allocation4 + $0xe8] sm:$0xff]
        %v1692 = vld [vmem:[#allocation4 + $0xf0] sm:$0xff]
        %v1693 = vld [vmem:[#allocation4 + $0xf8] sm:$0xff]
        %v1696 = vunpack.c.l.b16 %v1660
        %v1697 = vunpack.c.h.b16 %v1660
        %v1698 = vunpack.c.l.b16 %v1661
        %v1699 = vunpack.c.h.b16 %v1661
        %v1700 = vpack.c.b16 %v1698, %v1696
        %v1701 = vpack.c.b16 %v1699, %v1697
        %v1736 = vunpack.c.l.b16 %v1662
        %v1737 = vunpack.c.h.b16 %v1662
        %v1738 = vunpack.c.l.b16 %v1663
        %v1739 = vunpack.c.h.b16 %v1663
        %v1740 = vunpack.c.l.b16 %v1664
        %v1741 = vunpack.c.h.b16 %v1664
        %v1742 = vunpack.c.l.b16 %v1665
        %v1743 = vunpack.c.h.b16 %v1665
        %v1744 = vunpack.c.l.b16 %v1666
        %v1745 = vunpack.c.h.b16 %v1666
        %v1746 = vunpack.c.l.b16 %v1667
        %v1747 = vunpack.c.h.b16 %v1667
        %v1748 = vunpack.c.l.b16 %v1668
        %v1749 = vunpack.c.h.b16 %v1668
        %v1750 = vunpack.c.l.b16 %v1669
        %v1751 = vunpack.c.h.b16 %v1669
        %v1752 = vunpack.c.l.b16 %v1670
        %v1753 = vunpack.c.h.b16 %v1670
        %v1754 = vunpack.c.l.b16 %v1671
        %v1755 = vunpack.c.h.b16 %v1671
        %v1756 = vunpack.c.l.b16 %v1672
        %v1757 = vunpack.c.h.b16 %v1672
        %v1758 = vunpack.c.l.b16 %v1673
        %v1759 = vunpack.c.h.b16 %v1673
        %v1760 = vunpack.c.l.b16 %v1674
        %v1761 = vunpack.c.h.b16 %v1674
        %v1762 = vunpack.c.l.b16 %v1675
        %v1763 = vunpack.c.h.b16 %v1675
        %v1764 = vunpack.c.l.b16 %v1676
        %v1765 = vunpack.c.h.b16 %v1676
        %v1766 = vunpack.c.l.b16 %v1677
        %v1767 = vunpack.c.h.b16 %v1677
        %v1768 = vunpack.c.l.b16 %v1678
        %v1769 = vunpack.c.h.b16 %v1678
        %v1770 = vunpack.c.l.b16 %v1679
        %v1771 = vunpack.c.h.b16 %v1679
        %v1772 = vunpack.c.l.b16 %v1680
        %v1773 = vunpack.c.h.b16 %v1680
        %v1774 = vunpack.c.l.b16 %v1681
        %v1775 = vunpack.c.h.b16 %v1681
        %v1776 = vunpack.c.l.b16 %v1682
        %v1777 = vunpack.c.h.b16 %v1682
        %v1778 = vunpack.c.l.b16 %v1683
        %v1779 = vunpack.c.h.b16 %v1683
        %v1780 = vunpack.c.l.b16 %v1684
        %v1781 = vunpack.c.h.b16 %v1684
        %v1782 = vunpack.c.l.b16 %v1685
        %v1783 = vunpack.c.h.b16 %v1685
        %v1784 = vunpack.c.l.b16 %v1686
        %v1785 = vunpack.c.h.b16 %v1686
        %v1786 = vunpack.c.l.b16 %v1687
        %v1787 = vunpack.c.h.b16 %v1687
        %v1788 = vunpack.c.l.b16 %v1688
        %v1789 = vunpack.c.h.b16 %v1688
        %v1790 = vunpack.c.l.b16 %v1689
        %v1791 = vunpack.c.h.b16 %v1689
        %v1792 = vunpack.c.l.b16 %v1690
        %v1793 = vunpack.c.h.b16 %v1690
        %v1794 = vunpack.c.l.b16 %v1691
        %v1795 = vunpack.c.h.b16 %v1691
        %v1796 = vunpack.c.l.b16 %v1692
        %v1797 = vunpack.c.h.b16 %v1692
        %v1798 = vunpack.c.l.b16 %v1693
        %v1799 = vunpack.c.h.b16 %v1693
        %v1800 = vpack.c.b16 %v1738, %v1736
        %v1801 = vpack.c.b16 %v1739, %v1737
        %v1802 = vpack.c.b16 %v1742, %v1740
        %v1803 = vpack.c.b16 %v1743, %v1741
        %v1804 = vpack.c.b16 %v1746, %v1744
        %v1805 = vpack.c.b16 %v1747, %v1745
        %v1806 = vpack.c.b16 %v1750, %v1748
        %v1807 = vpack.c.b16 %v1751, %v1749
        %v1808 = vpack.c.b16 %v1754, %v1752
        %v1809 = vpack.c.b16 %v1755, %v1753
        %v1810 = vpack.c.b16 %v1758, %v1756
        %v1811 = vpack.c.b16 %v1759, %v1757
        %v1812 = vpack.c.b16 %v1762, %v1760
        %v1813 = vpack.c.b16 %v1763, %v1761
        %v1814 = vpack.c.b16 %v1766, %v1764
        %v1815 = vpack.c.b16 %v1767, %v1765
        %v1816 = vpack.c.b16 %v1770, %v1768
        %v1817 = vpack.c.b16 %v1771, %v1769
        %v1818 = vpack.c.b16 %v1774, %v1772
        %v1819 = vpack.c.b16 %v1775, %v1773
        %v1820 = vpack.c.b16 %v1778, %v1776
        %v1821 = vpack.c.b16 %v1779, %v1777
        %v1822 = vpack.c.b16 %v1782, %v1780
        %v1823 = vpack.c.b16 %v1783, %v1781
        %v1824 = vpack.c.b16 %v1786, %v1784
        %v1825 = vpack.c.b16 %v1787, %v1785
        %v1826 = vpack.c.b16 %v1790, %v1788
        %v1827 = vpack.c.b16 %v1791, %v1789
        %v1828 = vpack.c.b16 %v1794, %v1792
        %v1829 = vpack.c.b16 %v1795, %v1793
        %v1830 = vpack.c.b16 %v1798, %v1796
        %v1831 = vpack.c.b16 %v1799, %v1797
        %1864 = vmatpush.bf16.msra.mxu0 %v1814
        %1865 = vmatpush.bf16.msra.mxu0 %v1812
        %1866 = vmatpush.bf16.msra.mxu0 %v1810
        %1867 = vmatpush.bf16.msra.mxu0 %v1808
        %1868 = vmatpush.bf16.msra.mxu0 %v1806
        %1869 = vmatpush.bf16.msra.mxu0 %v1804
        %1870 = vmatpush.bf16.msra.mxu0 %v1802
        %1871 = vmatpush.bf16.msra.mxu0 %v1800
        %1872 = vmatmul.bf16.gmra.mxu0 %v1700
        %v1873 = vpop.f32.mrf.mxu0
        %v1874 = vadd.f32 0.0, %v1873
        %v1875 = vpop.f32.mrf.mxu0
        %v1876 = vadd.f32 0.0, %v1875
        %1877 = vdwg.mxu0
        %1878 = vmatpush.bf16.msra.mxu0 %v1830
        %1879 = vmatpush.bf16.msra.mxu0 %v1828
        %1880 = vmatpush.bf16.msra.mxu0 %v1826
        %1881 = vmatpush.bf16.msra.mxu0 %v1824
        %1882 = vmatpush.bf16.msra.mxu0 %v1822
        %1883 = vmatpush.bf16.msra.mxu0 %v1820
        %1884 = vmatpush.bf16.msra.mxu0 %v1818
        %1885 = vmatpush.bf16.msra.mxu0 %v1816
        %1886 = vmatmul.bf16.gmra.mxu0 %v1701
        %v1887 = vpop.f32.mrf.mxu0
        %v1888 = vadd.f32 %v1874, %v1887
        %v1889 = vpop.f32.mrf.mxu0
        %v1890 = vadd.f32 %v1876, %v1889
        %1891 = vdwg.mxu0
        %1892 = vmatpush.bf16.msra.mxu0 %v1815
        %1893 = vmatpush.bf16.msra.mxu0 %v1813
        %1894 = vmatpush.bf16.msra.mxu0 %v1811
        %1895 = vmatpush.bf16.msra.mxu0 %v1809
        %1896 = vmatpush.bf16.msra.mxu0 %v1807
        %1897 = vmatpush.bf16.msra.mxu0 %v1805
        %1898 = vmatpush.bf16.msra.mxu0 %v1803
        %1899 = vmatpush.bf16.msra.mxu0 %v1801
        %1900 = vmatmul.bf16.gmra.mxu0 %v1700
        %v1901 = vpop.f32.mrf.mxu0
        %v1902 = vadd.f32 0.0, %v1901
        %v1903 = vpop.f32.mrf.mxu0
        %v1904 = vadd.f32 0.0, %v1903
        %1905 = vdwg.mxu0
        %1906 = vmatpush.bf16.msra.mxu0 %v1831
        %1907 = vmatpush.bf16.msra.mxu0 %v1829
        %1908 = vmatpush.bf16.msra.mxu0 %v1827
        %1909 = vmatpush.bf16.msra.mxu0 %v1825
        %1910 = vmatpush.bf16.msra.mxu0 %v1823
        %1911 = vmatpush.bf16.msra.mxu0 %v1821
        %1912 = vmatpush.bf16.msra.mxu0 %v1819
        %1913 = vmatpush.bf16.msra.mxu0 %v1817
        %1914 = vmatmul.bf16.gmra.mxu0 %v1701
        %v1915 = vpop.f32.mrf.mxu0
        %v1916 = vadd.f32 %v1902, %v1915
        %v1917 = vpop.f32.mrf.mxu0
        %v1918 = vadd.f32 %v1904, %v1917
        %1919 = vdwg.mxu0
        %v1920 = vpack.c.bf16 %v1916, %v1888
        %v1921 = vpack.c.bf16 %v1918, %v1890
        %v1922 = vld [vmem:[%s10] sm:$0x3]
        %v1924 = vperm.slane %v1922, 0
        %v1925 = vperm.slane %v1922, 1
        %v1928 = vpack.c.bf16 %v1925, %v1924
        %v1930 = vunpack.c.l.b16 %v1928
        %v1931 = vunpack.c.h.b16 %v1928
        %v1932 = vpack.c.b16 %v1930, %v1930
        %v1933 = vpack.c.b16 %v1931, %v1931
        %v1935 = vpack.i.b16 %v1932, %v1932
        %v1937 = vperm.slane %v1935, 0
        %v1939 = vpack.i.b16 %v1933, %v1933
        %v1941 = vperm.slane %v1939, 0
        %v1942 = vunpack.c.l.bf16 %v1920
        %v1943 = vunpack.c.h.bf16 %v1920
        %v1944 = vunpack.c.l.bf16 %v1921
        %v1945 = vunpack.c.h.bf16 %v1921
        %v1946 = vunpack.c.l.bf16 %v1937
        %v1947 = vunpack.c.l.bf16 %v1941
        %v1948 = vadd.f32 %v1942, %v1946
        %v1949 = vadd.f32 %v1943, %v1947
        %v1950 = vadd.f32 %v1944, %v1946
        %v1951 = vadd.f32 %v1945, %v1947
        %v1952 = vpack.c.bf16 %v1949, %v1948
        %v1953 = vpack.c.bf16 %v1951, %v1950
        %v1954 = vunpack.c.l.bf16 %v1952
        %v1955 = vunpack.c.h.bf16 %v1952
        %v1956 = vunpack.c.l.bf16 %v1953
        %v1957 = vunpack.c.h.bf16 %v1953
        %vm1958 = vcmp.gt.f32.partialorder %v1954, 0.0
        %vm1959 = vcmp.gt.f32.partialorder %v1955, 0.0
        %vm1960 = vcmp.gt.f32.partialorder %v1956, 0.0
        %vm1961 = vcmp.gt.f32.partialorder %v1957, 0.0
        %v1962 = vmul.f32 %v1954, 0.010009766
        %v1963 = vmul.f32 %v1955, 0.010009766
        %v1964 = vmul.f32 %v1956, 0.010009766
        %v1965 = vmul.f32 %v1957, 0.010009766
        %v1966 = vpack.c.bf16 %v1963, %v1962
        %v1967 = vpack.c.bf16 %v1965, %v1964
        %vm1968 = vmpackc.low %vm1959, %vm1958
        %vm1969 = vmpackc.low %vm1961, %vm1960
        %v1970 = vsel %vm1968, %v1952, %v1966
        %v1971 = vsel %vm1969, %v1953, %v1967
        %v1972 = vld [vmem:[#allocation6] sm:$0xff]
        %v1973 = vld [vmem:[#allocation6 + $0x8] sm:$0xff]
        %v1974 = vld [vmem:[#allocation6 + $0x10] sm:$0xff]
        %v1975 = vld [vmem:[#allocation6 + $0x18] sm:$0xff]
        %v1976 = vld [vmem:[#allocation6 + $0x20] sm:$0xff]
        %v1977 = vld [vmem:[#allocation6 + $0x28] sm:$0xff]
        %v1978 = vld [vmem:[#allocation6 + $0x30] sm:$0xff]
        %v1979 = vld [vmem:[#allocation6 + $0x38] sm:$0xff]
        %v1980 = vld [vmem:[#allocation6 + $0x40] sm:$0xff]
        %v1981 = vld [vmem:[#allocation6 + $0x48] sm:$0xff]
        %v1982 = vld [vmem:[#allocation6 + $0x50] sm:$0xff]
        %v1983 = vld [vmem:[#allocation6 + $0x58] sm:$0xff]
        %v1984 = vld [vmem:[#allocation6 + $0x60] sm:$0xff]
        %v1985 = vld [vmem:[#allocation6 + $0x68] sm:$0xff]
        %v1986 = vld [vmem:[#allocation6 + $0x70] sm:$0xff]
        %v1987 = vld [vmem:[#allocation6 + $0x78] sm:$0xff]
        %v1988 = vld [vmem:[#allocation6 + $0x80] sm:$0xff]
        %v1989 = vld [vmem:[#allocation6 + $0x88] sm:$0xff]
        %v1990 = vld [vmem:[#allocation6 + $0x90] sm:$0xff]
        %v1991 = vld [vmem:[#allocation6 + $0x98] sm:$0xff]
        %v1992 = vld [vmem:[#allocation6 + $0xa0] sm:$0xff]
        %v1993 = vld [vmem:[#allocation6 + $0xa8] sm:$0xff]
        %v1994 = vld [vmem:[#allocation6 + $0xb0] sm:$0xff]
        %v1995 = vld [vmem:[#allocation6 + $0xb8] sm:$0xff]
        %v1996 = vld [vmem:[#allocation6 + $0xc0] sm:$0xff]
        %v1997 = vld [vmem:[#allocation6 + $0xc8] sm:$0xff]
        %v1998 = vld [vmem:[#allocation6 + $0xd0] sm:$0xff]
        %v1999 = vld [vmem:[#allocation6 + $0xd8] sm:$0xff]
        %v2000 = vld [vmem:[#allocation6 + $0xe0] sm:$0xff]
        %v2001 = vld [vmem:[#allocation6 + $0xe8] sm:$0xff]
        %v2002 = vld [vmem:[#allocation6 + $0xf0] sm:$0xff]
        %v2003 = vld [vmem:[#allocation6 + $0xf8] sm:$0xff]
        %v2006 = vunpack.c.l.b16 %v1970
        %v2007 = vunpack.c.h.b16 %v1970
        %v2008 = vunpack.c.l.b16 %v1971
        %v2009 = vunpack.c.h.b16 %v1971
        %v2010 = vpack.c.b16 %v2008, %v2006
        %v2011 = vpack.c.b16 %v2009, %v2007
        %v2046 = vunpack.c.l.b16 %v1972
        %v2047 = vunpack.c.h.b16 %v1972
        %v2048 = vunpack.c.l.b16 %v1973
        %v2049 = vunpack.c.h.b16 %v1973
        %v2050 = vunpack.c.l.b16 %v1974
        %v2051 = vunpack.c.h.b16 %v1974
        %v2052 = vunpack.c.l.b16 %v1975
        %v2053 = vunpack.c.h.b16 %v1975
        %v2054 = vunpack.c.l.b16 %v1976
        %v2055 = vunpack.c.h.b16 %v1976
        %v2056 = vunpack.c.l.b16 %v1977
        %v2057 = vunpack.c.h.b16 %v1977
        %v2058 = vunpack.c.l.b16 %v1978
        %v2059 = vunpack.c.h.b16 %v1978
        %v2060 = vunpack.c.l.b16 %v1979
        %v2061 = vunpack.c.h.b16 %v1979
        %v2062 = vunpack.c.l.b16 %v1980
        %v2063 = vunpack.c.h.b16 %v1980
        %v2064 = vunpack.c.l.b16 %v1981
        %v2065 = vunpack.c.h.b16 %v1981
        %v2066 = vunpack.c.l.b16 %v1982
        %v2067 = vunpack.c.h.b16 %v1982
        %v2068 = vunpack.c.l.b16 %v1983
        %v2069 = vunpack.c.h.b16 %v1983
        %v2070 = vunpack.c.l.b16 %v1984
        %v2071 = vunpack.c.h.b16 %v1984
        %v2072 = vunpack.c.l.b16 %v1985
        %v2073 = vunpack.c.h.b16 %v1985
        %v2074 = vunpack.c.l.b16 %v1986
        %v2075 = vunpack.c.h.b16 %v1986
        %v2076 = vunpack.c.l.b16 %v1987
        %v2077 = vunpack.c.h.b16 %v1987
        %v2078 = vunpack.c.l.b16 %v1988
        %v2079 = vunpack.c.h.b16 %v1988
        %v2080 = vunpack.c.l.b16 %v1989
        %v2081 = vunpack.c.h.b16 %v1989
        %v2082 = vunpack.c.l.b16 %v1990
        %v2083 = vunpack.c.h.b16 %v1990
        %v2084 = vunpack.c.l.b16 %v1991
        %v2085 = vunpack.c.h.b16 %v1991
        %v2086 = vunpack.c.l.b16 %v1992
        %v2087 = vunpack.c.h.b16 %v1992
        %v2088 = vunpack.c.l.b16 %v1993
        %v2089 = vunpack.c.h.b16 %v1993
        %v2090 = vunpack.c.l.b16 %v1994
        %v2091 = vunpack.c.h.b16 %v1994
        %v2092 = vunpack.c.l.b16 %v1995
        %v2093 = vunpack.c.h.b16 %v1995
        %v2094 = vunpack.c.l.b16 %v1996
        %v2095 = vunpack.c.h.b16 %v1996
        %v2096 = vunpack.c.l.b16 %v1997
        %v2097 = vunpack.c.h.b16 %v1997
        %v2098 = vunpack.c.l.b16 %v1998
        %v2099 = vunpack.c.h.b16 %v1998
        %v2100 = vunpack.c.l.b16 %v1999
        %v2101 = vunpack.c.h.b16 %v1999
        %v2102 = vunpack.c.l.b16 %v2000
        %v2103 = vunpack.c.h.b16 %v2000
        %v2104 = vunpack.c.l.b16 %v2001
        %v2105 = vunpack.c.h.b16 %v2001
        %v2106 = vunpack.c.l.b16 %v2002
        %v2107 = vunpack.c.h.b16 %v2002
        %v2108 = vunpack.c.l.b16 %v2003
        %v2109 = vunpack.c.h.b16 %v2003
        %v2110 = vpack.c.b16 %v2048, %v2046
        %v2111 = vpack.c.b16 %v2049, %v2047
        %v2112 = vpack.c.b16 %v2052, %v2050
        %v2113 = vpack.c.b16 %v2053, %v2051
        %v2114 = vpack.c.b16 %v2056, %v2054
        %v2115 = vpack.c.b16 %v2057, %v2055
        %v2116 = vpack.c.b16 %v2060, %v2058
        %v2117 = vpack.c.b16 %v2061, %v2059
        %v2118 = vpack.c.b16 %v2064, %v2062
        %v2119 = vpack.c.b16 %v2065, %v2063
        %v2120 = vpack.c.b16 %v2068, %v2066
        %v2121 = vpack.c.b16 %v2069, %v2067
        %v2122 = vpack.c.b16 %v2072, %v2070
        %v2123 = vpack.c.b16 %v2073, %v2071
        %v2124 = vpack.c.b16 %v2076, %v2074
        %v2125 = vpack.c.b16 %v2077, %v2075
        %v2126 = vpack.c.b16 %v2080, %v2078
        %v2127 = vpack.c.b16 %v2081, %v2079
        %v2128 = vpack.c.b16 %v2084, %v2082
        %v2129 = vpack.c.b16 %v2085, %v2083
        %v2130 = vpack.c.b16 %v2088, %v2086
        %v2131 = vpack.c.b16 %v2089, %v2087
        %v2132 = vpack.c.b16 %v2092, %v2090
        %v2133 = vpack.c.b16 %v2093, %v2091
        %v2134 = vpack.c.b16 %v2096, %v2094
        %v2135 = vpack.c.b16 %v2097, %v2095
        %v2136 = vpack.c.b16 %v2100, %v2098
        %v2137 = vpack.c.b16 %v2101, %v2099
        %v2138 = vpack.c.b16 %v2104, %v2102
        %v2139 = vpack.c.b16 %v2105, %v2103
        %v2140 = vpack.c.b16 %v2108, %v2106
        %v2141 = vpack.c.b16 %v2109, %v2107
        %2174 = vmatpush.bf16.msra.mxu0 %v2124
        %2175 = vmatpush.bf16.msra.mxu0 %v2122
        %2176 = vmatpush.bf16.msra.mxu0 %v2120
        %2177 = vmatpush.bf16.msra.mxu0 %v2118
        %2178 = vmatpush.bf16.msra.mxu0 %v2116
        %2179 = vmatpush.bf16.msra.mxu0 %v2114
        %2180 = vmatpush.bf16.msra.mxu0 %v2112
        %2181 = vmatpush.bf16.msra.mxu0 %v2110
        %2182 = vmatmul.bf16.gmra.mxu0 %v2010
        %v2183 = vpop.f32.mrf.mxu0
        %v2184 = vadd.f32 0.0, %v2183
        %v2185 = vpop.f32.mrf.mxu0
        %v2186 = vadd.f32 0.0, %v2185
        %2187 = vdwg.mxu0
        %2188 = vmatpush.bf16.msra.mxu0 %v2140
        %2189 = vmatpush.bf16.msra.mxu0 %v2138
        %2190 = vmatpush.bf16.msra.mxu0 %v2136
        %2191 = vmatpush.bf16.msra.mxu0 %v2134
        %2192 = vmatpush.bf16.msra.mxu0 %v2132
        %2193 = vmatpush.bf16.msra.mxu0 %v2130
        %2194 = vmatpush.bf16.msra.mxu0 %v2128
        %2195 = vmatpush.bf16.msra.mxu0 %v2126
        %2196 = vmatmul.bf16.gmra.mxu0 %v2011
        %v2197 = vpop.f32.mrf.mxu0
        %v2198 = vadd.f32 %v2184, %v2197
        %v2199 = vpop.f32.mrf.mxu0
        %v2200 = vadd.f32 %v2186, %v2199
        %2201 = vdwg.mxu0
        %2202 = vmatpush.bf16.msra.mxu0 %v2125
        %2203 = vmatpush.bf16.msra.mxu0 %v2123
        %2204 = vmatpush.bf16.msra.mxu0 %v2121
        %2205 = vmatpush.bf16.msra.mxu0 %v2119
        %2206 = vmatpush.bf16.msra.mxu0 %v2117
        %2207 = vmatpush.bf16.msra.mxu0 %v2115
        %2208 = vmatpush.bf16.msra.mxu0 %v2113
        %2209 = vmatpush.bf16.msra.mxu0 %v2111
        %2210 = vmatmul.bf16.gmra.mxu0 %v2010
        %v2211 = vpop.f32.mrf.mxu0
        %v2212 = vadd.f32 0.0, %v2211
        %v2213 = vpop.f32.mrf.mxu0
        %v2214 = vadd.f32 0.0, %v2213
        %2215 = vdwg.mxu0
        %2216 = vmatpush.bf16.msra.mxu0 %v2141
        %2217 = vmatpush.bf16.msra.mxu0 %v2139
        %2218 = vmatpush.bf16.msra.mxu0 %v2137
        %2219 = vmatpush.bf16.msra.mxu0 %v2135
        %2220 = vmatpush.bf16.msra.mxu0 %v2133
        %2221 = vmatpush.bf16.msra.mxu0 %v2131
        %2222 = vmatpush.bf16.msra.mxu0 %v2129
        %2223 = vmatpush.bf16.msra.mxu0 %v2127
        %2224 = vmatmul.bf16.gmra.mxu0 %v2011
        %v2225 = vpop.f32.mrf.mxu0
        %v2226 = vadd.f32 %v2212, %v2225
        %v2227 = vpop.f32.mrf.mxu0
        %v2228 = vadd.f32 %v2214, %v2227
        %2229 = vdwg.mxu0
        %v2230 = vpack.c.bf16 %v2226, %v2198
        %v2231 = vpack.c.bf16 %v2228, %v2200
        %v2232 = vld [vmem:[%s12] sm:$0x3]
        %v2234 = vperm.slane %v2232, 0
        %v2235 = vperm.slane %v2232, 1
        %v2238 = vpack.c.bf16 %v2235, %v2234
        %v2240 = vunpack.c.l.b16 %v2238
        %v2241 = vunpack.c.h.b16 %v2238
        %v2242 = vpack.c.b16 %v2240, %v2240
        %v2243 = vpack.c.b16 %v2241, %v2241
        %v2245 = vpack.i.b16 %v2242, %v2242
        %v2247 = vperm.slane %v2245, 0
        %v2249 = vpack.i.b16 %v2243, %v2243
        %v2251 = vperm.slane %v2249, 0
        %v2252 = vunpack.c.l.bf16 %v2230
        %v2253 = vunpack.c.h.bf16 %v2230
        %v2254 = vunpack.c.l.bf16 %v2231
        %v2255 = vunpack.c.h.bf16 %v2231
        %v2256 = vunpack.c.l.bf16 %v2247
        %v2257 = vunpack.c.l.bf16 %v2251
        %v2258 = vadd.f32 %v2252, %v2256
        %v2259 = vadd.f32 %v2253, %v2257
        %v2260 = vadd.f32 %v2254, %v2256
        %v2261 = vadd.f32 %v2255, %v2257
        %v2262 = vpack.c.bf16 %v2259, %v2258
        %v2263 = vpack.c.bf16 %v2261, %v2260
        %v2264 = vunpack.c.l.bf16 %v2262
        %v2265 = vunpack.c.h.bf16 %v2262
        %v2266 = vunpack.c.l.bf16 %v2263
        %v2267 = vunpack.c.h.bf16 %v2263
        %vm2268 = vcmp.gt.f32.partialorder %v2264, 0.0
        %vm2269 = vcmp.gt.f32.partialorder %v2265, 0.0
        %vm2270 = vcmp.gt.f32.partialorder %v2266, 0.0
        %vm2271 = vcmp.gt.f32.partialorder %v2267, 0.0
        %v2272 = vmul.f32 %v2264, 0.010009766
        %v2273 = vmul.f32 %v2265, 0.010009766
        %v2274 = vmul.f32 %v2266, 0.010009766
        %v2275 = vmul.f32 %v2267, 0.010009766
        %v2276 = vpack.c.bf16 %v2273, %v2272
        %v2277 = vpack.c.bf16 %v2275, %v2274
        %vm2278 = vmpackc.low %vm2269, %vm2268
        %vm2279 = vmpackc.low %vm2271, %vm2270
        %v2280 = vsel %vm2278, %v2262, %v2276
        %v2281 = vsel %vm2279, %v2263, %v2277
        %v2282 = vld [vmem:[%s13] sm:$0xf]
        %v2283 = vld [vmem:[%s13 + $0x4] sm:$0xf]
        %v2284 = vld [vmem:[%s13 + $0x8] sm:$0xf]
        %v2285 = vld [vmem:[%s13 + $0xc] sm:$0xf]
        %v2286 = vld [vmem:[%s13 + $0x10] sm:$0xf]
        %v2287 = vld [vmem:[%s13 + $0x14] sm:$0xf]
        %v2288 = vld [vmem:[%s13 + $0x18] sm:$0xf]
        %v2289 = vld [vmem:[%s13 + $0x1c] sm:$0xf]
        %v2290 = vld [vmem:[%s13 + $0x20] sm:$0xf]
        %v2291 = vld [vmem:[%s13 + $0x24] sm:$0xf]
        %v2292 = vld [vmem:[%s13 + $0x28] sm:$0xf]
        %v2293 = vld [vmem:[%s13 + $0x2c] sm:$0xf]
        %v2294 = vld [vmem:[%s13 + $0x30] sm:$0xf]
        %v2295 = vld [vmem:[%s13 + $0x34] sm:$0xf]
        %v2296 = vld [vmem:[%s13 + $0x38] sm:$0xf]
        %v2297 = vld [vmem:[%s13 + $0x3c] sm:$0xf]
        %v2298 = vld [vmem:[%s13 + $0x40] sm:$0xf]
        %v2299 = vld [vmem:[%s13 + $0x44] sm:$0xf]
        %v2300 = vld [vmem:[%s13 + $0x48] sm:$0xf]
        %v2301 = vld [vmem:[%s13 + $0x4c] sm:$0xf]
        %v2302 = vld [vmem:[%s13 + $0x50] sm:$0xf]
        %v2303 = vld [vmem:[%s13 + $0x54] sm:$0xf]
        %v2304 = vld [vmem:[%s13 + $0x58] sm:$0xf]
        %v2305 = vld [vmem:[%s13 + $0x5c] sm:$0xf]
        %v2306 = vld [vmem:[%s13 + $0x60] sm:$0xf]
        %v2307 = vld [vmem:[%s13 + $0x64] sm:$0xf]
        %v2308 = vld [vmem:[%s13 + $0x68] sm:$0xf]
        %v2309 = vld [vmem:[%s13 + $0x6c] sm:$0xf]
        %v2310 = vld [vmem:[%s13 + $0x70] sm:$0xf]
        %v2311 = vld [vmem:[%s13 + $0x74] sm:$0xf]
        %v2312 = vld [vmem:[%s13 + $0x78] sm:$0xf]
        %v2313 = vld [vmem:[%s13 + $0x7c] sm:$0xf]
        %v2314 = vld [vmem:[%s14] sm:$0x1]
        %v2316 = vperm.slane %v2314, 0
        %v2320 = vunpack.c.l.b16 %v2280
        %v2321 = vunpack.c.h.b16 %v2280
        %v2322 = vunpack.c.l.b16 %v2281
        %v2323 = vunpack.c.h.b16 %v2281
        %v2324 = vpack.c.b16 %v2322, %v2320
        %v2325 = vpack.c.b16 %v2323, %v2321
        %v2360 = vunpack.c.l.b16 %v2282
        %v2361 = vunpack.c.l.b16 %v2283
        %v2362 = vunpack.c.l.b16 %v2284
        %v2363 = vunpack.c.l.b16 %v2285
        %v2364 = vunpack.c.l.b16 %v2286
        %v2365 = vunpack.c.l.b16 %v2287
        %v2366 = vunpack.c.l.b16 %v2288
        %v2367 = vunpack.c.l.b16 %v2289
        %v2368 = vunpack.c.l.b16 %v2290
        %v2369 = vunpack.c.l.b16 %v2291
        %v2370 = vunpack.c.l.b16 %v2292
        %v2371 = vunpack.c.l.b16 %v2293
        %v2372 = vunpack.c.l.b16 %v2294
        %v2373 = vunpack.c.l.b16 %v2295
        %v2374 = vunpack.c.l.b16 %v2296
        %v2375 = vunpack.c.l.b16 %v2297
        %v2376 = vunpack.c.l.b16 %v2298
        %v2377 = vunpack.c.l.b16 %v2299
        %v2378 = vunpack.c.l.b16 %v2300
        %v2379 = vunpack.c.l.b16 %v2301
        %v2380 = vunpack.c.l.b16 %v2302
        %v2381 = vunpack.c.l.b16 %v2303
        %v2382 = vunpack.c.l.b16 %v2304
        %v2383 = vunpack.c.l.b16 %v2305
        %v2384 = vunpack.c.l.b16 %v2306
        %v2385 = vunpack.c.l.b16 %v2307
        %v2386 = vunpack.c.l.b16 %v2308
        %v2387 = vunpack.c.l.b16 %v2309
        %v2388 = vunpack.c.l.b16 %v2310
        %v2389 = vunpack.c.l.b16 %v2311
        %v2390 = vunpack.c.l.b16 %v2312
        %v2391 = vunpack.c.l.b16 %v2313
        %v2392 = vpack.c.b16 %v2361, %v2360
        %v2393 = vpack.c.b16 %v2363, %v2362
        %v2394 = vpack.c.b16 %v2365, %v2364
        %v2395 = vpack.c.b16 %v2367, %v2366
        %v2396 = vpack.c.b16 %v2369, %v2368
        %v2397 = vpack.c.b16 %v2371, %v2370
        %v2398 = vpack.c.b16 %v2373, %v2372
        %v2399 = vpack.c.b16 %v2375, %v2374
        %v2400 = vpack.c.b16 %v2377, %v2376
        %v2401 = vpack.c.b16 %v2379, %v2378
        %v2402 = vpack.c.b16 %v2381, %v2380
        %v2403 = vpack.c.b16 %v2383, %v2382
        %v2404 = vpack.c.b16 %v2385, %v2384
        %v2405 = vpack.c.b16 %v2387, %v2386
        %v2406 = vpack.c.b16 %v2389, %v2388
        %v2407 = vpack.c.b16 %v2391, %v2390
        %2424 = vmatpush.bf16.msra.mxu0 %v2399
        %2425 = vmatpush.bf16.msra.mxu0 %v2398
        %2426 = vmatpush.bf16.msra.mxu0 %v2397
        %2427 = vmatpush.bf16.msra.mxu0 %v2396
        %2428 = vmatpush.bf16.msra.mxu0 %v2395
        %2429 = vmatpush.bf16.msra.mxu0 %v2394
        %2430 = vmatpush.bf16.msra.mxu0 %v2393
        %2431 = vmatpush.bf16.msra.mxu0 %v2392
        %2432 = vmatmul.bf16.gmra.mxu0 %v2324
        %v2433 = vpop.f32.mrf.mxu0
        %v2434 = vadd.f32 %v2316, %v2433
        %v2435 = vpop.f32.mrf.mxu0
        %v2436 = vadd.f32 %v2316, %v2435
        %2437 = vdwg.mxu0
        %2438 = vmatpush.bf16.msra.mxu0 %v2407
        %2439 = vmatpush.bf16.msra.mxu0 %v2406
        %2440 = vmatpush.bf16.msra.mxu0 %v2405
        %2441 = vmatpush.bf16.msra.mxu0 %v2404
        %2442 = vmatpush.bf16.msra.mxu0 %v2403
        %2443 = vmatpush.bf16.msra.mxu0 %v2402
        %2444 = vmatpush.bf16.msra.mxu0 %v2401
        %2445 = vmatpush.bf16.msra.mxu0 %v2400
        %2446 = vmatmul.bf16.gmra.mxu0 %v2325
        %v2447 = vpop.f32.mrf.mxu0
        %v2448 = vadd.f32 %v2434, %v2447
        %v2449 = vpop.f32.mrf.mxu0
        %v2450 = vadd.f32 %v2436, %v2449
        %2451 = vdwg.mxu0
        %2454 = vrot.lane.b32.xlu0 %v2448, 120
        %v2455 = vpop.permute.xlu0 %2454
        %2456 = vrot.lane.b32.xlu0 %v2450, 120
        %v2457 = vpop.permute.xlu0 %2456
        %v2460 = vsub.f32 %v2448, %v2455
        %v2461 = vsub.f32 %v2450, %v2457
        %v2462 = vsub.f32 0.0, %v2460
        %v2463 = vsub.f32 0.0, %v2461
        %v2464 = vmul.f32 %v2462, 1.442695
        %v2465 = vpow.pop %v2464
        %v2466 = vmul.f32 %v2463, 1.442695
        %v2467 = vpow.pop %v2466
        %v2468 = vadd.f32 %v2465, 1.0
        %v2469 = vadd.f32 %v2467, 1.0
        %v2470 = vrcp.pop %v2468
        %v2471 = vmul.f32 %v2468, %v2470
        %v2472 = vsub.f32 1.0, %v2471
        %v2473 = vmul.f32 %v2470, %v2472
        %v2474 = vadd.f32 %v2470, %v2473
        %vm2475 = vweird.f32 %v2468
        %vm2476 = vweird.f32 %v2470
        %vm2477 = vmor %vm2475, %vm2476
        %v2478 = vsel %vm2477, %v2470, %v2474
        %v2479 = vand.u32 2147483647, %v2468
        %vm2480 = vcmp.eq.f32.partialorder %v2479, 8.507059e+37
        %v2481 = vand.u32 %v2468, 2147483648
        %v2482 = vor.u32 1.1754944e-38, %v2481
        %v2483 = vsel %vm2480, %v2482, %v2478
        %v2484 = vrcp.pop %v2469
        %v2485 = vmul.f32 %v2469, %v2484
        %v2486 = vsub.f32 1.0, %v2485
        %v2487 = vmul.f32 %v2484, %v2486
        %v2488 = vadd.f32 %v2484, %v2487
        %vm2489 = vweird.f32 %v2469
        %vm2490 = vweird.f32 %v2484
        %vm2491 = vmor %vm2489, %vm2490
        %v2492 = vsel %vm2491, %v2484, %v2488
        %v2493 = vand.u32 2147483647, %v2469
        %vm2494 = vcmp.eq.f32.partialorder %v2493, 8.507059e+37
        %v2495 = vand.u32 %v2469, 2147483648
        %v2496 = vor.u32 1.1754944e-38, %v2495
        %v2497 = vsel %vm2494, %v2496, %v2492
        %v2498 = vsub.f32 1.0, %v2483
        %v2499 = vsub.f32 1.0, %v2497
        %2502 = vrot.lane.b32.xlu0 %v2498, 8
        %v2503 = vpop.permute.xlu0 %2502
        %2504 = vrot.lane.b32.xlu0 %v2499, 8
        %v2505 = vpop.permute.xlu0 %2504
        %vm2508 = vcmask 64512
        %v2509 = vsel %vm2508, %v2483, %v2503
        %v2510 = vsel %vm2508, %v2497, %v2505
        %vm2511 = vcmask 130048
        %2512 = vst.msk [vmem:[%s546] sm:$0xff] %vm2511, %v2509
        %2513 = vst.msk [vmem:[%s546 + $0x8] sm:$0xff] %vm2511, %v2510
        %s2514 = smul.u32 2, %s28
        %p2515 = scmp.lt.s32.totalorder %s2514, 3
        %s2516 = scalar_select %p2515, %s2514, 3
        %s2517 = smul.addr %s2516, 8
        %s2518 = scalar_lea.vmem %s15, %s2517
        // Predicated region
        $region93: #{mlp_mach3_forward.1} parent=79 // pred_check
          %p2519 = pneg %p366
        $region94: #{mlp_mach3_forward.1} parent=79 // pred_check_branch
          %2521 = sbr.rel (%p2519) target = $region96
        $region95: #{mlp_mach3_forward.1} parent=79 // pred_region
          %s2522 = smul.u32 2, %s28
        $region96: #{mlp_mach3_forward.1} parent=79 // pred_fallthru
          _
      $region80: #{mlp_mach3_forward.1} parent=5 // pred_fallthru
        _
      %p2523 = scmp.le.s32.totalorder 2, %s23
      // Predicated region
      $region97: #{mlp_mach3_forward.1} parent=5 // pred_check
        %p2524 = pneg %p2523
      $region98: #{mlp_mach3_forward.1} parent=5 // pred_check_branch
        %2526 = sbr.rel (%p2524) target = $region100
      $region99: #{mlp_mach3_forward.1} parent=5 // pred_region
        %s2527 = ssub.s32 %s23, 2
        // Predicated region
        $region101: #{mlp_mach3_forward.1} parent=99 // pred_check
          %p2528 = pneg %p372
        $region102: #{mlp_mach3_forward.1} parent=99 // pred_check_branch
          %2530 = sbr.rel (%p2528) target = $region104
        $region103: #{mlp_mach3_forward.1} parent=99 // pred_region
          %s2531 = smul.u32 2, %s29
          %p2532 = scmp.lt.s32.totalorder %s2531, 3
          %s2533 = scalar_select %p2532, %s2531, 3
          %s2534 = smul.addr %s2533, 8
          %s2535 = scalar_lea.vmem %s15, %s2534
        $region104: #{mlp_mach3_forward.1} parent=99 // pred_fallthru
          _
      $region100: #{mlp_mach3_forward.1} parent=5 // pred_fallthru
        _
    $region6: #{mlp_mach3_forward.1} parent=1 // loop_footer
      %s27 = sadd.s32 1, %s23
    $region7: #{mlp_mach3_forward.1} parent=1 // loop_footer_branch
      %22 = sbr.rel target = $region3
    $region8: #{mlp_mach3_forward.1} parent=1 // loop_exit
      _
    %2536 = vsyncpa [#allocation3], 1
    %s2537 = scalar_lea.sflag [#allocation3], 1
    %2538 = vsyncpa %s2537, 1
    %2539 = vsyncpa [#allocation5], 1

</llo_original>
